<compile_context>
chip_gen: v5e
topology: v5e:2x2
jax: 0.10.0
libtpu: 0.0.40
codegen_flags: <defaults>
</compile_context>

<pallas_src>
import functools

import jax
import jax.numpy as jnp
from jax import lax
from jax.experimental import pallas as pl
from jax.experimental.pallas import tpu as pltpu

NUM_GROUPS = 16
EPS = 1e-6


def _vmem_limit_bytes():
    """Generation-aware VMEM cap: physical VMEM minus 16 MiB headroom, in [32, 96] MiB."""
    cap = 64 * 1024 * 1024                       # conservative default (v7x physical)
    try:
        cap = int(pltpu.get_tpu_info().vmem_capacity_bytes)
    except Exception:
        pass
    return int(min(96 * 1024 * 1024, max(32 * 1024 * 1024, cap - 16 * 1024 * 1024)))


def _pick_tile(total, target):
    """Largest divisor of `total` <= target, preferring multiples of 256, then 8."""
    if total <= target:
        return total
    for step in (256, 8):
        t = (target // step) * step
        while t >= step:
            if total % t == 0:
                return t
            t -= step
    return total


# --------------------------------------------------------------------------- #
# Stage 2: GroupNorm apply (pre-folded scale/shift) + fused q/k/v projection.  #
# --------------------------------------------------------------------------- #
def _norm_qkv_kernel(x_ref, scale_ref, shift_ref, w_ref, b_ref,
                     q_ref, k_ref, v_ref, *, c):
    x = x_ref[...].astype(jnp.float32)                     # (thw, C)
    hn = x * scale_ref[...] + shift_ref[...]               # GroupNorm, f32
    hn = hn.astype(w_ref.dtype)                            # bf16 (or f32) MXU input
    qkv = jnp.dot(hn, w_ref[...],
                  preferred_element_type=jnp.float32) + b_ref[...]   # (thw, 3C) f32
    # Softmax scale C**-0.5 is already folded into the q columns of w/b.
    q_ref[...] = qkv[:, :c].astype(q_ref.dtype)
    k_ref[...] = qkv[:, c:2 * c].astype(k_ref.dtype)
    v_ref[...] = qkv[:, 2 * c:].astype(v_ref.dtype)


# --------------------------------------------------------------------------- #
# Stage 3: flash attention with per-batch VMEM-resident K/V, in-kernel k loop, #
#          fused proj_out + residual.                                          #
# --------------------------------------------------------------------------- #
def _flash_attn_kernel(q_ref, k_ref, v_ref, x_ref, wp_ref, bp_ref, o_ref,
                       m_sc, l_sc, acc_sc, *, tk, n_k, approx_recip):
    # One (batch, q-tile) per grid step: init accumulators unconditionally.
    m_sc[...] = jnp.full_like(m_sc, -jnp.inf)
    l_sc[...] = jnp.zeros_like(l_sc)
    acc_sc[...] = jnp.zeros_like(acc_sc)

    q = q_ref[...]                                          # (tq, C) compute dtype

    def body(ki, carry):
        start = pl.multiple_of(ki * tk, tk)                 # aligned slice start
        k = k_ref[pl.ds(start, tk), :]                      # (tk, C), resident K
        v = v_ref[pl.ds(start, tk), :]                      # (tk, C), resident V
        # NT matmul (contract channel dims) -- no explicit transpose of k.
        s = lax.dot_general(q, k, (((1,), (1,)), ((), ())),
                            preferred_element_type=jnp.float32)   # (tq, tk) f32

        m_prev = m_sc[...]
        m_new = jnp.maximum(m_prev, jnp.max(s, axis=-1, keepdims=True))
        # alpha is finite: scores are finite, so m_new > -inf always.
        alpha = jnp.exp(m_prev - m_new)
        p = jnp.exp(s - m_new)
        l_sc[...] = alpha * l_sc[...] + jnp.sum(p, axis=-1, keepdims=True)
        acc_sc[...] = alpha * acc_sc[...] + jnp.dot(
            p.astype(v.dtype), v, preferred_element_type=jnp.float32)
        m_sc[...] = m_new
        return carry

    lax.fori_loop(0, n_k, body, 0, unroll=(n_k <= 8))

    inv_l = pl.reciprocal(l_sc[...], approx=approx_recip)
    attn_out = (acc_sc[...] * inv_l).astype(wp_ref.dtype)            # (tq, C)
    proj = jnp.dot(attn_out, wp_ref[...],
                   preferred_element_type=jnp.float32) + bp_ref[...]
    o_ref[...] = (x_ref[...].astype(jnp.float32) + proj).astype(o_ref.dtype)


def spatial_self_attention(x_nchw, params, *, compute_dtype=jnp.bfloat16):
    """Forward pass. x_nchw: (B, C, H, W) float32. params: dict of conv/norm params."""
    B, C, H, W = x_nchw.shape
    assert C % NUM_GROUPS == 0, "in_channels must be divisible by num_groups=16"
    HW = H * W
    cpg = C // NUM_GROUPS
    approx_recip = jnp.dtype(compute_dtype) != jnp.dtype(jnp.float32)
    vmem_limit = _vmem_limit_bytes()

    x32 = x_nchw.astype(jnp.float32)

    # ---- GroupNorm statistics in plain XLA (pure HBM-roofline reduction) -------
    sum_c = jnp.sum(x32, axis=(2, 3))                       # (B, C)
    sq_c = jnp.sum(x32 * x32, axis=(2, 3))                  # (B, C)
    n = float(HW * cpg)
    mean_g = sum_c.reshape(B, NUM_GROUPS, cpg).sum(-1) / n  # (B, G)
    ex2_g = sq_c.reshape(B, NUM_GROUPS, cpg).sum(-1) / n
    var_g = jnp.maximum(ex2_g - mean_g * mean_g, 0.0)       # clamp >= 0
    rstd_g = lax.rsqrt(var_g + EPS)
    mean_c = jnp.repeat(mean_g, cpg, axis=-1)               # (B, C)
    rstd_c = jnp.repeat(rstd_g, cpg, axis=-1)

    gamma = params["gamma"].reshape(1, C).astype(jnp.float32)
    beta = params["beta"].reshape(1, C).astype(jnp.float32)
    scale_c = (rstd_c * gamma).reshape(B, 1, C)             # hn = x * scale + shift
    shift_c = (beta - mean_c * rstd_c * gamma).reshape(B, 1, C)

    # NCHW -> (B, HW, C): channels on the lane (minor) dim.
    x = jnp.transpose(x32.reshape(B, C, HW), (0, 2, 1))

    # Fused, pre-transposed q/k/v weights; softmax scale folded into q.
    attn_scale = float(C) ** (-0.5)

    def w_t(w):                                  # (Cout, Cin, 1, 1) -> (Cin, Cout)
        return w.reshape(C, C).astype(jnp.float32).T

    w_qkv = jnp.concatenate(
        [w_t(params["wq"]) * attn_scale, w_t(params["wk"]), w_t(params["wv"])],
        axis=1).astype(compute_dtype)                                 # (C, 3C)
    b_qkv = jnp.concatenate(
        [params["bq"].astype(jnp.float32) * attn_scale,
         params["bk"].astype(jnp.float32),
         params["bv"].astype(jnp.float32)]).reshape(1, 3 * C)         # (1, 3C)

    # ---------------- stage 2: norm apply + fused qkv projection ----------------
    thw = _pick_tile(HW, 1024)
    n_hw = HW // thw

    q, k, v = pl.pallas_call(
        functools.partial(_norm_qkv_kernel, c=C),
        out_shape=tuple(jax.ShapeDtypeStruct((B, HW, C), compute_dtype)
                        for _ in range(3)),
        grid_spec=pltpu.PrefetchScalarGridSpec(
            num_scalar_prefetch=0,
            grid=(B, n_hw),
            in_specs=[
                pl.BlockSpec((None, thw, C), lambda b, i: (b, i, 0)),    # x
                pl.BlockSpec((None, 1, C), lambda b, i: (b, 0, 0)),      # scale
                pl.BlockSpec((None, 1, C), lambda b, i: (b, 0, 0)),      # shift
                pl.BlockSpec((C, 3 * C), lambda b, i: (0, 0)),           # w_qkv
                pl.BlockSpec((1, 3 * C), lambda b, i: (0, 0)),           # b_qkv
            ],
            out_specs=tuple(pl.BlockSpec((None, thw, C), lambda b, i: (b, i, 0))
                            for _ in range(3))),
        compiler_params=pltpu.CompilerParams(
            dimension_semantics=("parallel", "parallel"),
            vmem_limit_bytes=vmem_limit),
    )(x, scale_c, shift_c, w_qkv, b_qkv)

    # ---------------- stage 3: flash attention + proj_out + residual ------------
    tq = _pick_tile(HW, 512)
    tk = _pick_tile(HW, 1024)
    n_q = HW // tq
    n_k = HW // tk

    w_p = params["wp"].reshape(C, C).astype(jnp.float32).T.astype(compute_dtype)
    b_p = params["bp"].reshape(1, C).astype(jnp.float32)

    out = pl.pallas_call(
        functools.partial(_flash_attn_kernel, tk=tk, n_k=n_k,
                          approx_recip=approx_recip),
        out_shape=jax.ShapeDtypeStruct((B, HW, C), x.dtype),
        grid_spec=pltpu.PrefetchScalarGridSpec(
            num_scalar_prefetch=0,
            grid=(B, n_q),
            in_specs=[
                pl.BlockSpec((None, tq, C), lambda b, qi: (b, qi, 0)),   # q tile
                pl.BlockSpec((None, HW, C), lambda b, qi: (b, 0, 0)),    # K (resident/batch)
                pl.BlockSpec((None, HW, C), lambda b, qi: (b, 0, 0)),    # V (resident/batch)
                pl.BlockSpec((None, tq, C), lambda b, qi: (b, qi, 0)),   # x residual
                pl.BlockSpec((C, C), lambda b, qi: (0, 0)),              # w_proj
                pl.BlockSpec((1, C), lambda b, qi: (0, 0)),              # b_proj
            ],
            out_specs=pl.BlockSpec((None, tq, C), lambda b, qi: (b, qi, 0)),
            scratch_shapes=[pltpu.VMEM((tq, 1), jnp.float32),    # m
                            pltpu.VMEM((tq, 1), jnp.float32),    # l
                            pltpu.VMEM((tq, C), jnp.float32)]),  # acc
        compiler_params=pltpu.CompilerParams(
            dimension_semantics=("parallel", "parallel"),
            vmem_limit_bytes=vmem_limit),
        input_output_aliases={3: 0},   # reuse the residual-x buffer for the output
    )(q, k, v, x, w_p, b_p)

    # (B, HW, C) -> NCHW
    return jnp.transpose(out, (0, 2, 1)).reshape(B, C, H, W)


# --------------------------------------------------------------------------- #
# Pure-JAX reference matching the PyTorch module semantics.                    #
# --------------------------------------------------------------------------- #
def reference_forward(x, p):
    B, C, H, W = x.shape
    G = NUM_GROUPS
    xr = x.reshape(B, G, C // G, H, W)
    mean = xr.mean(axis=(2, 3, 4), keepdims=True)
    var = xr.var(axis=(2, 3, 4), keepdims=True)
    hn = ((xr - mean) / jnp.sqrt(var + EPS)).reshape(B, C, H, W)
    hn = hn * p["gamma"][None, :, None, None] + p["beta"][None, :, None, None]

    def conv1x1(z, w, b):
        return jnp.einsum("bchw,oc->bohw", z, w.reshape(C, C)) + b[None, :, None, None]

    q = conv1x1(hn, p["wq"], p["bq"]).reshape(B, C, H * W).transpose(0, 2, 1)
    k = conv1x1(hn, p["wk"], p["bk"]).reshape(B, C, H * W)
    v = conv1x1(hn, p["wv"], p["bv"]).reshape(B, C, H * W)
    w_ = jnp.einsum("bij,bjk->bik", q, k) * (C ** -0.5)
    w_ = jax.nn.softmax(w_, axis=2)
    h_ = jnp.einsum("bij,bjk->bik", v, w_.transpose(0, 2, 1))
    h_ = h_.reshape(B, C, H, W)
    h_ = conv1x1(h_, p["wp"], p["bp"])
    return x + h_


def make_params(key, C):
    keys = jax.random.split(key, 8)
    std = 0.1
    return {
        "gamma": jnp.ones((C,), jnp.float32),
        "beta": jnp.zeros((C,), jnp.float32),
        "wq": std * jax.random.normal(keys[0], (C, C, 1, 1), jnp.float32),
        "bq": std * jax.random.normal(keys[1], (C,), jnp.float32),
        "wk": std * jax.random.normal(keys[2], (C, C, 1, 1), jnp.float32),
        "bk": std * jax.random.normal(keys[3], (C,), jnp.float32),
        "wv": std * jax.random.normal(keys[4], (C, C, 1, 1), jnp.float32),
        "bv": std * jax.random.normal(keys[5], (C,), jnp.float32),
        "wp": std * jax.random.normal(keys[6], (C, C, 1, 1), jnp.float32),
        "bp": std * jax.random.normal(keys[7], (C,), jnp.float32),
    }


if __name__ == "__main__":
    key = jax.random.PRNGKey(0)
    kx, kp = jax.random.split(key)

    B, C, H, W = 2, 32, 8, 8   # C must be divisible by num_groups=16
    x = jax.random.normal(kx, (B, C, H, W), jnp.float32)
    params = make_params(kp, C)

    ref = reference_forward(x, params)

    # f32 compute path: tight check of the tiled kernel structure / math.
    fwd_f32 = jax.jit(functools.partial(spatial_self_attention,
                                        compute_dtype=jnp.float32))
    out_f32 = jax.block_until_ready(fwd_f32(x, params))
    assert out_f32.shape == (B, C, H, W)
    assert jnp.allclose(out_f32, ref, atol=1e-4, rtol=1e-4), \
        f"f32 max err {jnp.max(jnp.abs(out_f32 - ref))}"

    # bf16 MXU path (default): looser tolerance consistent with bf16 input rounding.
    fwd_bf16 = jax.jit(functools.partial(spatial_self_attention,
                                         compute_dtype=jnp.bfloat16))
    out_bf16 = jax.block_until_ready(fwd_bf16(x, params))
    assert out_bf16.shape == (B, C, H, W)
    assert jnp.allclose(out_bf16, ref, atol=5e-2, rtol=5e-2), \
        f"bf16 max err {jnp.max(jnp.abs(out_bf16 - ref))}"

    print("KERNEL_OK")
</pallas_src>

<mosaic_0001>
module attributes {stable_mosaic.version = 11 : i64} {
  func.func @_norm_qkv_kernel(%arg0: i32, %arg1: i32, %arg2: memref<1x64x32xf32, #tpu.memory_space<vmem>>, %arg3: memref<1x1x32xf32, #tpu.memory_space<vmem>>, %arg4: memref<1x1x32xf32, #tpu.memory_space<vmem>>, %arg5: memref<32x96xf32, #tpu.memory_space<vmem>>, %arg6: memref<1x96xf32, #tpu.memory_space<vmem>>, %arg7: memref<1x64x32xf32, #tpu.memory_space<vmem>>, %arg8: memref<1x64x32xf32, #tpu.memory_space<vmem>>, %arg9: memref<1x64x32xf32, #tpu.memory_space<vmem>>) attributes {dimension_semantics = [#tpu.dimension_semantics<parallel>, #tpu.dimension_semantics<parallel>], iteration_bounds = array<i64: 2, 1>, scalar_prefetch = 0 : i64, scratch_operands = 0 : i64, tpu.core_type = #tpu.core_type<tc>, window_params = [{transform_indices = @transform_0, window_bounds = array<i64: 1, 64, 32>}, {transform_indices = @transform_1, window_bounds = array<i64: 1, 1, 32>}, {transform_indices = @transform_2, window_bounds = array<i64: 1, 1, 32>}, {pipeline_mode = #tpu.pipeline_mode<synchronous>, transform_indices = @transform_3, window_bounds = array<i64: 32, 96>}, {pipeline_mode = #tpu.pipeline_mode<synchronous>, transform_indices = @transform_4, window_bounds = array<i64: 1, 96>}, {transform_indices = @transform_5, window_bounds = array<i64: 1, 64, 32>}, {transform_indices = @transform_6, window_bounds = array<i64: 1, 64, 32>}, {transform_indices = @transform_7, window_bounds = array<i64: 1, 64, 32>}]} {
    %c0 = arith.constant 0 : index
    %c0_0 = arith.constant 0 : index
    %c0_1 = arith.constant 0 : index
    %0 = vector.load %arg2[%c0, %c0_0, %c0_1] : memref<1x64x32xf32, #tpu.memory_space<vmem>>, vector<1x64x32xf32>
    %1 = vector.shape_cast %0 : vector<1x64x32xf32> to vector<64x32xf32>
    %c0_2 = arith.constant 0 : index
    %c0_3 = arith.constant 0 : index
    %c0_4 = arith.constant 0 : index
    %2 = vector.load %arg3[%c0_2, %c0_3, %c0_4] : memref<1x1x32xf32, #tpu.memory_space<vmem>>, vector<1x1x32xf32>
    %3 = vector.shape_cast %2 : vector<1x1x32xf32> to vector<1x32xf32>
    %4 = vector.broadcast %3 : vector<1x32xf32> to vector<64x32xf32>
    %5 = arith.mulf %1, %4 : vector<64x32xf32>
    %c0_5 = arith.constant 0 : index
    %c0_6 = arith.constant 0 : index
    %c0_7 = arith.constant 0 : index
    %6 = vector.load %arg4[%c0_5, %c0_6, %c0_7] : memref<1x1x32xf32, #tpu.memory_space<vmem>>, vector<1x1x32xf32>
    %7 = vector.shape_cast %6 : vector<1x1x32xf32> to vector<1x32xf32>
    %8 = vector.broadcast %7 : vector<1x32xf32> to vector<64x32xf32>
    %9 = arith.addf %5, %8 : vector<64x32xf32>
    %c0_8 = arith.constant 0 : index
    %c0_9 = arith.constant 0 : index
    %10 = vector.load %arg5[%c0_8, %c0_9] : memref<32x96xf32, #tpu.memory_space<vmem>>, vector<32x96xf32>
    %cst = arith.constant dense<0.000000e+00> : vector<64x96xf32>
    %11 = tpu.matmul %9, %10, %cst {dimension_numbers = #tpu.dot_dimension_numbers<[1], [0], [0], [1], [0, 0, 1, 1], [], []>} : vector<64x32xf32>, vector<32x96xf32>, vector<64x96xf32> -> vector<64x96xf32>
    %c0_10 = arith.constant 0 : index
    %c0_11 = arith.constant 0 : index
    %12 = vector.load %arg6[%c0_10, %c0_11] : memref<1x96xf32, #tpu.memory_space<vmem>>, vector<1x96xf32>
    %13 = vector.broadcast %12 : vector<1x96xf32> to vector<64x96xf32>
    %14 = arith.addf %11, %13 : vector<64x96xf32>
    %15 = vector.extract_strided_slice %14 {offsets = [0, 0], sizes = [64, 32], strides = [1, 1]} : vector<64x96xf32> to vector<64x32xf32>
    %c0_12 = arith.constant 0 : index
    %c0_13 = arith.constant 0 : index
    %c0_14 = arith.constant 0 : index
    %16 = vector.load %arg7[%c0_12, %c0_13, %c0_14] : memref<1x64x32xf32, #tpu.memory_space<vmem>>, vector<1x64x32xf32>
    %17 = vector.shape_cast %16 : vector<1x64x32xf32> to vector<64x32xf32>
    %18 = vector.shape_cast %15 : vector<64x32xf32> to vector<1x64x32xf32>
    tpu.vector_store %arg7[%c0_12, %c0_13, %c0_14], %18 {strides = array<i32>} : memref<1x64x32xf32, #tpu.memory_space<vmem>>, vector<1x64x32xf32>,
    %19 = vector.extract_strided_slice %14 {offsets = [0, 32], sizes = [64, 32], strides = [1, 1]} : vector<64x96xf32> to vector<64x32xf32>
    %c0_15 = arith.constant 0 : index
    %c0_16 = arith.constant 0 : index
    %c0_17 = arith.constant 0 : index
    %20 = vector.load %arg8[%c0_15, %c0_16, %c0_17] : memref<1x64x32xf32, #tpu.memory_space<vmem>>, vector<1x64x32xf32>
    %21 = vector.shape_cast %20 : vector<1x64x32xf32> to vector<64x32xf32>
    %22 = vector.shape_cast %19 : vector<64x32xf32> to vector<1x64x32xf32>
    tpu.vector_store %arg8[%c0_15, %c0_16, %c0_17], %22 {strides = array<i32>} : memref<1x64x32xf32, #tpu.memory_space<vmem>>, vector<1x64x32xf32>,
    %23 = vector.extract_strided_slice %14 {offsets = [0, 64], sizes = [64, 32], strides = [1, 1]} : vector<64x96xf32> to vector<64x32xf32>
    %c0_18 = arith.constant 0 : index
    %c0_19 = arith.constant 0 : index
    %c0_20 = arith.constant 0 : index
    %24 = vector.load %arg9[%c0_18, %c0_19, %c0_20] : memref<1x64x32xf32, #tpu.memory_space<vmem>>, vector<1x64x32xf32>
    %25 = vector.shape_cast %24 : vector<1x64x32xf32> to vector<64x32xf32>
    %26 = vector.shape_cast %23 : vector<64x32xf32> to vector<1x64x32xf32>
    tpu.vector_store %arg9[%c0_18, %c0_19, %c0_20], %26 {strides = array<i32>} : memref<1x64x32xf32, #tpu.memory_space<vmem>>, vector<1x64x32xf32>,
    return
  }
  func.func @transform_0(%arg0: i32, %arg1: i32) -> (i32, i32, i32) {
    %c0_i32 = arith.constant 0 : i32
    %c0_i32_0 = arith.constant 0 : i32
    return %arg0, %arg1, %c0_i32 : i32, i32, i32
  }
  func.func @transform_1(%arg0: i32, %arg1: i32) -> (i32, i32, i32) {
    %c0_i32 = arith.constant 0 : i32
    %c0_i32_0 = arith.constant 0 : i32
    %c0_i32_1 = arith.constant 0 : i32
    return %arg0, %c0_i32, %c0_i32_0 : i32, i32, i32
  }
  func.func @transform_2(%arg0: i32, %arg1: i32) -> (i32, i32, i32) {
    %c0_i32 = arith.constant 0 : i32
    %c0_i32_0 = arith.constant 0 : i32
    %c0_i32_1 = arith.constant 0 : i32
    return %arg0, %c0_i32, %c0_i32_0 : i32, i32, i32
  }
  func.func @transform_3(%arg0: i32, %arg1: i32) -> (i32, i32) {
    %c0_i32 = arith.constant 0 : i32
    %c0_i32_0 = arith.constant 0 : i32
    %c0_i32_1 = arith.constant 0 : i32
    return %c0_i32, %c0_i32_0 : i32, i32
  }
  func.func @transform_4(%arg0: i32, %arg1: i32) -> (i32, i32) {
    %c0_i32 = arith.constant 0 : i32
    %c0_i32_0 = arith.constant 0 : i32
    %c0_i32_1 = arith.constant 0 : i32
    return %c0_i32, %c0_i32_0 : i32, i32
  }
  func.func @transform_5(%arg0: i32, %arg1: i32) -> (i32, i32, i32) {
    %c0_i32 = arith.constant 0 : i32
    %c0_i32_0 = arith.constant 0 : i32
    return %arg0, %arg1, %c0_i32 : i32, i32, i32
  }
  func.func @transform_6(%arg0: i32, %arg1: i32) -> (i32, i32, i32) {
    %c0_i32 = arith.constant 0 : i32
    %c0_i32_0 = arith.constant 0 : i32
    return %arg0, %arg1, %c0_i32 : i32, i32, i32
  }
  func.func @transform_7(%arg0: i32, %arg1: i32) -> (i32, i32, i32) {
    %c0_i32 = arith.constant 0 : i32
    %c0_i32_0 = arith.constant 0 : i32
    return %arg0, %arg1, %c0_i32 : i32, i32, i32
  }
}

module attributes {stable_mosaic.version = 11 : i64} {
  func.func @_flash_attn_kernel(%arg0: i32, %arg1: i32, %arg2: memref<1x64x32xf32, #tpu.memory_space<vmem>>, %arg3: memref<1x64x32xf32, #tpu.memory_space<vmem>>, %arg4: memref<1x64x32xf32, #tpu.memory_space<vmem>>, %arg5: memref<1x64x32xf32, #tpu.memory_space<vmem>>, %arg6: memref<32x32xf32, #tpu.memory_space<vmem>>, %arg7: memref<1x32xf32, #tpu.memory_space<vmem>>, %arg8: memref<1x64x32xf32, #tpu.memory_space<vmem>>, %arg9: memref<64x1xf32, #tpu.memory_space<vmem>>, %arg10: memref<64x1xf32, #tpu.memory_space<vmem>>, %arg11: memref<64x32xf32, #tpu.memory_space<vmem>>) attributes {dimension_semantics = [#tpu.dimension_semantics<parallel>, #tpu.dimension_semantics<parallel>], iteration_bounds = array<i64: 2, 1>, scalar_prefetch = 0 : i64, scratch_operands = 3 : i64, tpu.core_type = #tpu.core_type<tc>, window_params = [{transform_indices = @transform_0, window_bounds = array<i64: 1, 64, 32>}, {transform_indices = @transform_1, window_bounds = array<i64: 1, 64, 32>}, {transform_indices = @transform_2, window_bounds = array<i64: 1, 64, 32>}, {transform_indices = @transform_3, window_bounds = array<i64: 1, 64, 32>}, {pipeline_mode = #tpu.pipeline_mode<synchronous>, transform_indices = @transform_4, window_bounds = array<i64: 32, 32>}, {pipeline_mode = #tpu.pipeline_mode<synchronous>, transform_indices = @transform_5, window_bounds = array<i64: 1, 32>}, {transform_indices = @transform_6, window_bounds = array<i64: 1, 64, 32>}]} {
    %cst = arith.constant 0xFF800000 : f32
    %0 = vector.broadcast %cst : f32 to vector<64x1xf32>
    %c0 = arith.constant 0 : index
    %c0_0 = arith.constant 0 : index
    %1 = vector.load %arg9[%c0, %c0_0] : memref<64x1xf32, #tpu.memory_space<vmem>>, vector<64x1xf32>
    tpu.vector_store %arg9[%c0, %c0_0], %0 {strides = array<i32>} : memref<64x1xf32, #tpu.memory_space<vmem>>, vector<64x1xf32>,
    %cst_1 = arith.constant 0.000000e+00 : f32
    %2 = vector.broadcast %cst_1 : f32 to vector<64x1xf32>
    %c0_2 = arith.constant 0 : index
    %c0_3 = arith.constant 0 : index
    %3 = vector.load %arg10[%c0_2, %c0_3] : memref<64x1xf32, #tpu.memory_space<vmem>>, vector<64x1xf32>
    tpu.vector_store %arg10[%c0_2, %c0_3], %2 {strides = array<i32>} : memref<64x1xf32, #tpu.memory_space<vmem>>, vector<64x1xf32>,
    %cst_4 = arith.constant 0.000000e+00 : f32
    %4 = vector.broadcast %cst_4 : f32 to vector<64x32xf32>
    %c0_5 = arith.constant 0 : index
    %c0_6 = arith.constant 0 : index
    %5 = vector.load %arg11[%c0_5, %c0_6] : memref<64x32xf32, #tpu.memory_space<vmem>>, vector<64x32xf32>
    tpu.vector_store %arg11[%c0_5, %c0_6], %4 {strides = array<i32>} : memref<64x32xf32, #tpu.memory_space<vmem>>, vector<64x32xf32>,
    %c0_7 = arith.constant 0 : index
    %c0_8 = arith.constant 0 : index
    %c0_9 = arith.constant 0 : index
    %6 = vector.load %arg2[%c0_7, %c0_8, %c0_9] : memref<1x64x32xf32, #tpu.memory_space<vmem>>, vector<1x64x32xf32>
    %7 = vector.shape_cast %6 : vector<1x64x32xf32> to vector<64x32xf32>
    %c0_i32 = arith.constant 0 : i32
    %c64_i32 = arith.constant 64 : i32
    %8 = arith.muli %c0_i32, %c64_i32 : i32
    %9 = tpu.assume_multiple %8, 64 : i32
    %c0_10 = arith.constant 0 : index
    %10 = arith.index_cast %9 : i32 to index
    %c0_11 = arith.constant 0 : index
    %11 = vector.load %arg3[%c0_10, %10, %c0_11] : memref<1x64x32xf32, #tpu.memory_space<vmem>>, vector<1x64x32xf32>
    %12 = vector.shape_cast %11 : vector<1x64x32xf32> to vector<64x32xf32>
    %c0_12 = arith.constant 0 : index
    %13 = arith.index_cast %9 : i32 to index
    %c0_13 = arith.constant 0 : index
    %14 = vector.load %arg4[%c0_12, %13, %c0_13] : memref<1x64x32xf32, #tpu.memory_space<vmem>>, vector<1x64x32xf32>
    %15 = vector.shape_cast %14 : vector<1x64x32xf32> to vector<64x32xf32>
    %cst_14 = arith.constant dense<0.000000e+00> : vector<64x64xf32>
    %16 = tpu.matmul %7, %12, %cst_14 {dimension_numbers = #tpu.dot_dimension_numbers<[1], [1], [0], [0], [0, 0, 1, 0], [], []>} : vector<64x32xf32>, vector<64x32xf32>, vector<64x64xf32> -> vector<64x64xf32>
    %c0_15 = arith.constant 0 : index
    %c0_16 = arith.constant 0 : index
    %17 = vector.load %arg9[%c0_15, %c0_16] : memref<64x1xf32, #tpu.memory_space<vmem>>, vector<64x1xf32>
    %cst_17 = arith.constant dense<0xFF800000> : vector<64xf32>
    %18 = vector.multi_reduction <maximumf>, %16, %cst_17 [1] : vector<64x64xf32> to vector<64xf32>
    %19 = vector.shape_cast %18 : vector<64xf32> to vector<64x1xf32>
    %20 = arith.maximumf %17, %19 : vector<64x1xf32>
    %21 = arith.subf %17, %20 : vector<64x1xf32>
    %22 = math.exp %21 : vector<64x1xf32>
    %23 = vector.broadcast %20 : vector<64x1xf32> to vector<64x64xf32>
    %24 = arith.subf %16, %23 : vector<64x64xf32>
    %25 = math.exp %24 : vector<64x64xf32>
    %c0_18 = arith.constant 0 : index
    %c0_19 = arith.constant 0 : index
    %26 = vector.load %arg10[%c0_18, %c0_19] : memref<64x1xf32, #tpu.memory_space<vmem>>, vector<64x1xf32>
    %27 = arith.mulf %22, %26 : vector<64x1xf32>
    %cst_20 = arith.constant dense<0.000000e+00> : vector<64xf32>
    %28 = vector.multi_reduction <add>, %25, %cst_20 [1] : vector<64x64xf32> to vector<64xf32>
    %29 = vector.shape_cast %28 : vector<64xf32> to vector<64x1xf32>
    %30 = arith.addf %27, %29 : vector<64x1xf32>
    %c0_21 = arith.constant 0 : index
    %c0_22 = arith.constant 0 : index
    %31 = vector.load %arg10[%c0_21, %c0_22] : memref<64x1xf32, #tpu.memory_space<vmem>>, vector<64x1xf32>
    tpu.vector_store %arg10[%c0_21, %c0_22], %30 {strides = array<i32>} : memref<64x1xf32, #tpu.memory_space<vmem>>, vector<64x1xf32>,
    %c0_23 = arith.constant 0 : index
    %c0_24 = arith.constant 0 : index
    %32 = vector.load %arg11[%c0_23, %c0_24] : memref<64x32xf32, #tpu.memory_space<vmem>>, vector<64x32xf32>
    %33 = vector.broadcast %22 : vector<64x1xf32> to vector<64x32xf32>
    %34 = arith.mulf %33, %32 : vector<64x32xf32>
    %cst_25 = arith.constant dense<0.000000e+00> : vector<64x32xf32>
    %35 = tpu.matmul %25, %15, %cst_25 {dimension_numbers = #tpu.dot_dimension_numbers<[1], [0], [0], [1], [0, 0, 1, 1], [], []>} : vector<64x64xf32>, vector<64x32xf32>, vector<64x32xf32> -> vector<64x32xf32>
    %36 = arith.addf %34, %35 : vector<64x32xf32>
    %c0_26 = arith.constant 0 : index
    %c0_27 = arith.constant 0 : index
    %37 = vector.load %arg11[%c0_26, %c0_27] : memref<64x32xf32, #tpu.memory_space<vmem>>, vector<64x32xf32>
    tpu.vector_store %arg11[%c0_26, %c0_27], %36 {strides = array<i32>} : memref<64x32xf32, #tpu.memory_space<vmem>>, vector<64x32xf32>,
    %c0_28 = arith.constant 0 : index
    %c0_29 = arith.constant 0 : index
    %38 = vector.load %arg9[%c0_28, %c0_29] : memref<64x1xf32, #tpu.memory_space<vmem>>, vector<64x1xf32>
    tpu.vector_store %arg9[%c0_28, %c0_29], %20 {strides = array<i32>} : memref<64x1xf32, #tpu.memory_space<vmem>>, vector<64x1xf32>,
    %c1_i32 = arith.constant 1 : i32
    %c0_30 = arith.constant 0 : index
    %c0_31 = arith.constant 0 : index
    %39 = vector.load %arg10[%c0_30, %c0_31] : memref<64x1xf32, #tpu.memory_space<vmem>>, vector<64x1xf32>
    %40 = tpu.reciprocal %39 : vector<64x1xf32> -> vector<64x1xf32>
    %c0_32 = arith.constant 0 : index
    %c0_33 = arith.constant 0 : index
    %41 = vector.load %arg11[%c0_32, %c0_33] : memref<64x32xf32, #tpu.memory_space<vmem>>, vector<64x32xf32>
    %42 = vector.broadcast %40 : vector<64x1xf32> to vector<64x32xf32>
    %43 = arith.mulf %41, %42 : vector<64x32xf32>
    %c0_34 = arith.constant 0 : index
    %c0_35 = arith.constant 0 : index
    %44 = vector.load %arg6[%c0_34, %c0_35] : memref<32x32xf32, #tpu.memory_space<vmem>>, vector<32x32xf32>
    %cst_36 = arith.constant dense<0.000000e+00> : vector<64x32xf32>
    %45 = tpu.matmul %43, %44, %cst_36 {dimension_numbers = #tpu.dot_dimension_numbers<[1], [0], [0], [1], [0, 0, 1, 1], [], []>} : vector<64x32xf32>, vector<32x32xf32>, vector<64x32xf32> -> vector<64x32xf32>
    %c0_37 = arith.constant 0 : index
    %c0_38 = arith.constant 0 : index
    %46 = vector.load %arg7[%c0_37, %c0_38] : memref<1x32xf32, #tpu.memory_space<vmem>>, vector<1x32xf32>
    %47 = vector.broadcast %46 : vector<1x32xf32> to vector<64x32xf32>
    %48 = arith.addf %45, %47 : vector<64x32xf32>
    %c0_39 = arith.constant 0 : index
    %c0_40 = arith.constant 0 : index
    %c0_41 = arith.constant 0 : index
    %49 = vector.load %arg5[%c0_39, %c0_40, %c0_41] : memref<1x64x32xf32, #tpu.memory_space<vmem>>, vector<1x64x32xf32>
    %50 = vector.shape_cast %49 : vector<1x64x32xf32> to vector<64x32xf32>
    %51 = arith.addf %50, %48 : vector<64x32xf32>
    %c0_42 = arith.constant 0 : index
    %c0_43 = arith.constant 0 : index
    %c0_44 = arith.constant 0 : index
    %52 = vector.load %arg8[%c0_42, %c0_43, %c0_44] : memref<1x64x32xf32, #tpu.memory_space<vmem>>, vector<1x64x32xf32>
    %53 = vector.shape_cast %52 : vector<1x64x32xf32> to vector<64x32xf32>
    %54 = vector.shape_cast %51 : vector<64x32xf32> to vector<1x64x32xf32>
    tpu.vector_store %arg8[%c0_42, %c0_43, %c0_44], %54 {strides = array<i32>} : memref<1x64x32xf32, #tpu.memory_space<vmem>>, vector<1x64x32xf32>,
    return
  }
  func.func @transform_0(%arg0: i32, %arg1: i32) -> (i32, i32, i32) {
    %c0_i32 = arith.constant 0 : i32
    %c0_i32_0 = arith.constant 0 : i32
    return %arg0, %arg1, %c0_i32 : i32, i32, i32
  }
  func.func @transform_1(%arg0: i32, %arg1: i32) -> (i32, i32, i32) {
    %c0_i32 = arith.constant 0 : i32
    %c0_i32_0 = arith.constant 0 : i32
    %c0_i32_1 = arith.constant 0 : i32
    return %arg0, %c0_i32, %c0_i32_0 : i32, i32, i32
  }
  func.func @transform_2(%arg0: i32, %arg1: i32) -> (i32, i32, i32) {
    %c0_i32 = arith.constant 0 : i32
    %c0_i32_0 = arith.constant 0 : i32
    %c0_i32_1 = arith.constant 0 : i32
    return %arg0, %c0_i32, %c0_i32_0 : i32, i32, i32
  }
  func.func @transform_3(%arg0: i32, %arg1: i32) -> (i32, i32, i32) {
    %c0_i32 = arith.constant 0 : i32
    %c0_i32_0 = arith.constant 0 : i32
    return %arg0, %arg1, %c0_i32 : i32, i32, i32
  }
  func.func @transform_4(%arg0: i32, %arg1: i32) -> (i32, i32) {
    %c0_i32 = arith.constant 0 : i32
    %c0_i32_0 = arith.constant 0 : i32
    %c0_i32_1 = arith.constant 0 : i32
    return %c0_i32, %c0_i32_0 : i32, i32
  }
  func.func @transform_5(%arg0: i32, %arg1: i32) -> (i32, i32) {
    %c0_i32 = arith.constant 0 : i32
    %c0_i32_0 = arith.constant 0 : i32
    %c0_i32_1 = arith.constant 0 : i32
    return %c0_i32, %c0_i32_0 : i32, i32
  }
  func.func @transform_6(%arg0: i32, %arg1: i32) -> (i32, i32, i32) {
    %c0_i32 = arith.constant 0 : i32
    %c0_i32_0 = arith.constant 0 : i32
    return %arg0, %arg1, %c0_i32 : i32, i32, i32
  }
}

</mosaic_0001>

<llo_original>
// kernel: spatial_self_attention.2
$region0: #{spatial_self_attention.2}
  #allocation0 [shape = 'u32[]', space=smem, size = 0x4, offset = 0x4, fixed_abs, tag = 'smem constant byte address 0x4 - core index']
  #allocation1 [shape = 'u32[72,128]{1,0:T(1,128)}', space=vmem, size = 0x9000, scoped, tag = 'internal scratch']
  %s0 = inlined_call_operand.vmem [shape: f32[2,64,32], index: 0, kind: input, shape index: {}]
  %s1 = inlined_call_operand.vmem [shape: f32[2,1,32], index: 1, kind: input, shape index: {}]
  %s2 = inlined_call_operand.vmem [shape: f32[2,1,32], index: 2, kind: input, shape index: {}]
  %s3 = inlined_call_operand.vmem [shape: f32[32,96], index: 3, kind: input, shape index: {}]
  %s4 = inlined_call_operand.vmem [shape: f32[1,96], index: 4, kind: input, shape index: {}]
  %s5 = inlined_call_operand.vmem [shape: f32[2,64,32], index: 5, kind: output, shape index: {0}]
  %s6 = inlined_call_operand.vmem [shape: f32[2,64,32], index: 6, kind: output, shape index: {1}]
  %s7 = inlined_call_operand.vmem [shape: f32[2,64,32], index: 7, kind: output, shape index: {2}]
  %8 = xla_tuple %s5, %s6, %s7
  %s9 = sld [smem:[#allocation0]]
  $region69: #{spatial_self_attention.2} parent=0
    _
  %s11 = ssub.s32 1, %s9
  %s12 = scalar_select 0, %s11, %s9
  loop: start=0, step=1, limit=4
  $region2: #{spatial_self_attention.2} parent=0 // loop_pre_header
    _
  $region3: #{spatial_self_attention.2} parent=0 // loop_header
    %s14 = sphi 0, %s18
    %p15 = scmp.ge.s32.totalorder %s14, 4
    %s21 = sphi 0, %s33
    %s22 = sphi 0, %s29
    %s23 = sphi 0, %s21
    %s24 = sphi 0, %s22
    %s25 = sphi 0, %s23
    %s26 = sphi 0, %s24
    %s38 = sphi 0, %s40
    %s41 = sphi 0, %s38
    %s42 = sphi 0, %s41
    %s58 = sphi 0, %s42
    %s64 = sphi 0, %s66
    %s67 = sphi 0, %s64
    %s68 = sphi 0, %s67
    %s84 = sphi 0, %s68
    %s90 = sphi 0, %s92
    %s93 = sphi 0, %s90
    %s94 = sphi 0, %s93
    %s110 = sphi 0, %s94
    %s114 = sphi 0, %s114
    %s116 = sphi 0, %s114
    %s117 = sphi 0, %s116
    %s131 = sphi 0, %s117
    %s135 = sphi 0, %s135
    %s137 = sphi 0, %s135
    %s138 = sphi 0, %s137
    %s152 = sphi 0, %s138
    %s160 = sphi 0, %s162
    %s163 = sphi 0, %s160
    %s164 = sphi 0, %s163
    %s180 = sphi 0, %s164
    %s188 = sphi 0, %s190
    %s191 = sphi 0, %s188
    %s192 = sphi 0, %s191
    %s208 = sphi 0, %s192
    %s216 = sphi 0, %s218
    %s219 = sphi 0, %s216
    %s220 = sphi 0, %s219
    %s236 = sphi 0, %s220
  $region4: #{spatial_self_attention.2} parent=0 // loop_header_branch
    %17 = sbr.rel (%p15) target = $region8
  $region5: #{spatial_self_attention.2} parent=0 // loop_body
    %s19 = ssub.s32 %s14, 1
    %s20 = ssub.s32 %s14, 2
    %s27 = sadd.s32 1, %s22
    %p28 = scmp.ge.s32.totalorder %s27, 1
    %s29 = scalar_select %p28, 0, %s27
    %s30 = sadd.s32 1, %s21
    %s31 = scalar_select %p28, %s30, %s21
    %p32 = scmp.ge.s32.totalorder %s31, 2
    %s33 = scalar_select %p32, 0, %s31
    %s34 = ssub.s32 %s21, %s33
    %s35 = ssub.s32 %s22, %s29
    %s36 = sor.u32 %s34, %s35
    %p37 = scmp.eq.s32.totalorder %s36, 0
    %s39 = sadd.s32 %s38, 1
    %s40 = scalar_select %p37, %s38, %s39
    %p43 = pneg %p37
    %p44 = scmp.eq.s32.totalorder %s14, 1
    %p45 = por %p43, %p44
    %p46 = scmp.ne.s32.totalorder %s38, %s41
    %p47 = scmp.eq.s32.totalorder %s14, 0
    %p48 = por %p46, %p47
    %p49 = scmp.ne.s32.totalorder %s38, %s41
    %p50 = scmp.eq.s32.totalorder %s19, 1
    %p51 = por %p49, %p50
    %p52 = scmp.ne.s32.totalorder %s41, %s42
    %p53 = scmp.eq.s32.totalorder %s19, 0
    %p54 = por %p52, %p53
    %p55 = scmp.ne.s32.totalorder %s41, %s42
    %p56 = scmp.eq.s32.totalorder %s20, 1
    %p57 = por %p55, %p56
    %p59 = scmp.ne.s32.totalorder %s42, %s58
    %p60 = scmp.eq.s32.totalorder %s20, 0
    %p61 = por %p59, %p60
    %s62 = ssub.s32 %s21, %s33
    %p63 = scmp.eq.s32.totalorder %s62, 0
    %s65 = sadd.s32 %s64, 1
    %s66 = scalar_select %p63, %s64, %s65
    %p69 = pneg %p63
    %p70 = scmp.eq.s32.totalorder %s14, 1
    %p71 = por %p69, %p70
    %p72 = scmp.ne.s32.totalorder %s64, %s67
    %p73 = scmp.eq.s32.totalorder %s14, 0
    %p74 = por %p72, %p73
    %p75 = scmp.ne.s32.totalorder %s64, %s67
    %p76 = scmp.eq.s32.totalorder %s19, 1
    %p77 = por %p75, %p76
    %p78 = scmp.ne.s32.totalorder %s67, %s68
    %p79 = scmp.eq.s32.totalorder %s19, 0
    %p80 = por %p78, %p79
    %p81 = scmp.ne.s32.totalorder %s67, %s68
    %p82 = scmp.eq.s32.totalorder %s20, 1
    %p83 = por %p81, %p82
    %p85 = scmp.ne.s32.totalorder %s68, %s84
    %p86 = scmp.eq.s32.totalorder %s20, 0
    %p87 = por %p85, %p86
    %s88 = ssub.s32 %s21, %s33
    %p89 = scmp.eq.s32.totalorder %s88, 0
    %s91 = sadd.s32 %s90, 1
    %s92 = scalar_select %p89, %s90, %s91
    %p95 = pneg %p89
    %p96 = scmp.eq.s32.totalorder %s14, 1
    %p97 = por %p95, %p96
    %p98 = scmp.ne.s32.totalorder %s90, %s93
    %p99 = scmp.eq.s32.totalorder %s14, 0
    %p100 = por %p98, %p99
    %p101 = scmp.ne.s32.totalorder %s90, %s93
    %p102 = scmp.eq.s32.totalorder %s19, 1
    %p103 = por %p101, %p102
    %p104 = scmp.ne.s32.totalorder %s93, %s94
    %p105 = scmp.eq.s32.totalorder %s19, 0
    %p106 = por %p104, %p105
    %p107 = scmp.ne.s32.totalorder %s93, %s94
    %p108 = scmp.eq.s32.totalorder %s20, 1
    %p109 = por %p107, %p108
    %p111 = scmp.ne.s32.totalorder %s94, %s110
    %p112 = scmp.eq.s32.totalorder %s20, 0
    %p113 = por %p111, %p112
    %s115 = sadd.s32 %s114, 1
    %p118 = scmp.eq.s32.totalorder %s14, 1
    %p119 = scmp.ne.s32.totalorder %s114, %s116
    %p120 = scmp.eq.s32.totalorder %s14, 0
    %p121 = por %p119, %p120
    %p122 = scmp.ne.s32.totalorder %s114, %s116
    %p123 = scmp.eq.s32.totalorder %s19, 1
    %p124 = por %p122, %p123
    %p125 = scmp.ne.s32.totalorder %s116, %s117
    %p126 = scmp.eq.s32.totalorder %s19, 0
    %p127 = por %p125, %p126
    %p128 = scmp.ne.s32.totalorder %s116, %s117
    %p129 = scmp.eq.s32.totalorder %s20, 1
    %p130 = por %p128, %p129
    %p132 = scmp.ne.s32.totalorder %s117, %s131
    %p133 = scmp.eq.s32.totalorder %s20, 0
    %p134 = por %p132, %p133
    %s136 = sadd.s32 %s135, 1
    %p139 = scmp.eq.s32.totalorder %s14, 1
    %p140 = scmp.ne.s32.totalorder %s135, %s137
    %p141 = scmp.eq.s32.totalorder %s14, 0
    %p142 = por %p140, %p141
    %p143 = scmp.ne.s32.totalorder %s135, %s137
    %p144 = scmp.eq.s32.totalorder %s19, 1
    %p145 = por %p143, %p144
    %p146 = scmp.ne.s32.totalorder %s137, %s138
    %p147 = scmp.eq.s32.totalorder %s19, 0
    %p148 = por %p146, %p147
    %p149 = scmp.ne.s32.totalorder %s137, %s138
    %p150 = scmp.eq.s32.totalorder %s20, 1
    %p151 = por %p149, %p150
    %p153 = scmp.ne.s32.totalorder %s138, %s152
    %p154 = scmp.eq.s32.totalorder %s20, 0
    %p155 = por %p153, %p154
    %s156 = ssub.s32 %s21, %s33
    %s157 = ssub.s32 %s22, %s29
    %s158 = sor.u32 %s156, %s157
    %p159 = scmp.eq.s32.totalorder %s158, 0
    %s161 = sadd.s32 %s160, 1
    %s162 = scalar_select %p159, %s160, %s161
    %p165 = pneg %p159
    %p166 = scmp.eq.s32.totalorder %s14, 1
    %p167 = por %p165, %p166
    %p168 = scmp.ne.s32.totalorder %s160, %s163
    %p169 = scmp.eq.s32.totalorder %s14, 0
    %p170 = por %p168, %p169
    %p171 = scmp.ne.s32.totalorder %s160, %s163
    %p172 = scmp.eq.s32.totalorder %s19, 1
    %p173 = por %p171, %p172
    %p174 = scmp.ne.s32.totalorder %s163, %s164
    %p175 = scmp.eq.s32.totalorder %s19, 0
    %p176 = por %p174, %p175
    %p177 = scmp.ne.s32.totalorder %s163, %s164
    %p178 = scmp.eq.s32.totalorder %s20, 1
    %p179 = por %p177, %p178
    %p181 = scmp.ne.s32.totalorder %s164, %s180
    %p182 = scmp.eq.s32.totalorder %s20, 0
    %p183 = por %p181, %p182
    %s184 = ssub.s32 %s21, %s33
    %s185 = ssub.s32 %s22, %s29
    %s186 = sor.u32 %s184, %s185
    %p187 = scmp.eq.s32.totalorder %s186, 0
    %s189 = sadd.s32 %s188, 1
    %s190 = scalar_select %p187, %s188, %s189
    %p193 = pneg %p187
    %p194 = scmp.eq.s32.totalorder %s14, 1
    %p195 = por %p193, %p194
    %p196 = scmp.ne.s32.totalorder %s188, %s191
    %p197 = scmp.eq.s32.totalorder %s14, 0
    %p198 = por %p196, %p197
    %p199 = scmp.ne.s32.totalorder %s188, %s191
    %p200 = scmp.eq.s32.totalorder %s19, 1
    %p201 = por %p199, %p200
    %p202 = scmp.ne.s32.totalorder %s191, %s192
    %p203 = scmp.eq.s32.totalorder %s19, 0
    %p204 = por %p202, %p203
    %p205 = scmp.ne.s32.totalorder %s191, %s192
    %p206 = scmp.eq.s32.totalorder %s20, 1
    %p207 = por %p205, %p206
    %p209 = scmp.ne.s32.totalorder %s192, %s208
    %p210 = scmp.eq.s32.totalorder %s20, 0
    %p211 = por %p209, %p210
    %s212 = ssub.s32 %s21, %s33
    %s213 = ssub.s32 %s22, %s29
    %s214 = sor.u32 %s212, %s213
    %p215 = scmp.eq.s32.totalorder %s214, 0
    %s217 = sadd.s32 %s216, 1
    %s218 = scalar_select %p215, %s216, %s217
    %p221 = pneg %p215
    %p222 = scmp.eq.s32.totalorder %s14, 1
    %p223 = por %p221, %p222
    %p224 = scmp.ne.s32.totalorder %s216, %s219
    %p225 = scmp.eq.s32.totalorder %s14, 0
    %p226 = por %p224, %p225
    %p227 = scmp.ne.s32.totalorder %s216, %s219
    %p228 = scmp.eq.s32.totalorder %s19, 1
    %p229 = por %p227, %p228
    %p230 = scmp.ne.s32.totalorder %s219, %s220
    %p231 = scmp.eq.s32.totalorder %s19, 0
    %p232 = por %p230, %p231
    %p233 = scmp.ne.s32.totalorder %s219, %s220
    %p234 = scmp.eq.s32.totalorder %s20, 1
    %p235 = por %p233, %p234
    %p237 = scmp.ne.s32.totalorder %s220, %s236
    %p238 = scmp.eq.s32.totalorder %s20, 0
    %p239 = por %p237, %p238
    %p240 = scmp.le.s32.totalorder 1, %s14
    %p241 = scmp.lt.s32.totalorder %s14, 3
    %p242 = pnand %p240, %p241
    %p243 = pneg %p242
    // Predicated region
    $region9: #{spatial_self_attention.2} parent=5 // pred_check
      _
    $region10: #{spatial_self_attention.2} parent=5 // pred_check_branch
      %245 = sbr.rel (%p242) target = $region12
    $region11: #{spatial_self_attention.2} parent=5 // pred_region
      %s246 = ssub.s32 %s14, 1
      // Predicated region
      $region13: #{spatial_self_attention.2} parent=11 // pred_check
        %p247 = pneg %p127
      $region14: #{spatial_self_attention.2} parent=11 // pred_check_branch
        %249 = sbr.rel (%p247) target = $region16
      $region15: #{spatial_self_attention.2} parent=11 // pred_region
        _
      $region16: #{spatial_self_attention.2} parent=11 // pred_fallthru
        _
      // Predicated region
      $region17: #{spatial_self_attention.2} parent=11 // pred_check
        %p250 = pneg %p148
      $region18: #{spatial_self_attention.2} parent=11 // pred_check_branch
        %252 = sbr.rel (%p250) target = $region20
      $region19: #{spatial_self_attention.2} parent=11 // pred_region
        _
      $region20: #{spatial_self_attention.2} parent=11 // pred_fallthru
        _
    $region12: #{spatial_self_attention.2} parent=5 // pred_fallthru
      _
    %p253 = scmp.lt.s32.totalorder %s14, 2
    // Predicated region
    $region21: #{spatial_self_attention.2} parent=5 // pred_check
      %p254 = pneg %p253
    $region22: #{spatial_self_attention.2} parent=5 // pred_check_branch
      %256 = sbr.rel (%p254) target = $region24
    $region23: #{spatial_self_attention.2} parent=5 // pred_region
      // Predicated region
      $region25: #{spatial_self_attention.2} parent=23 // pred_check
        %p257 = pneg %p48
      $region26: #{spatial_self_attention.2} parent=23 // pred_check_branch
        %259 = sbr.rel (%p257) target = $region28
      $region27: #{spatial_self_attention.2} parent=23 // pred_region
        %s260 = smul.u32 8, %s22
        %p261 = scmp.lt.s32.totalorder %s21, 1
        %s262 = scalar_select %p261, %s21, 1
        %p263 = scmp.lt.s32.totalorder %s260, 7
        %s264 = scalar_select %p263, %s260, 7
        %s265 = smul.addr %s262, 8
        %s266 = sadd.s32 %s264, %s265
        %s267 = smul.addr %s266, 8
        %s268 = scalar_lea.vmem %s0, %s267
        %s269 = smul.u32 8, %s22
      $region28: #{spatial_self_attention.2} parent=23 // pred_fallthru
        _
      // Predicated region
      $region29: #{spatial_self_attention.2} parent=23 // pred_check
        %p270 = pneg %p74
      $region30: #{spatial_self_attention.2} parent=23 // pred_check_branch
        %272 = sbr.rel (%p270) target = $region32
      $region31: #{spatial_self_attention.2} parent=23 // pred_region
        %p273 = scmp.lt.s32.totalorder %s21, 1
        %s274 = scalar_select %p273, %s21, 1
        %s275 = scalar_lea.vmem %s1, %s274
      $region32: #{spatial_self_attention.2} parent=23 // pred_fallthru
        _
      // Predicated region
      $region33: #{spatial_self_attention.2} parent=23 // pred_check
        %p276 = pneg %p100
      $region34: #{spatial_self_attention.2} parent=23 // pred_check_branch
        %278 = sbr.rel (%p276) target = $region36
      $region35: #{spatial_self_attention.2} parent=23 // pred_region
        %p279 = scmp.lt.s32.totalorder %s21, 1
        %s280 = scalar_select %p279, %s21, 1
        %s281 = scalar_lea.vmem %s2, %s280
      $region36: #{spatial_self_attention.2} parent=23 // pred_fallthru
        _
    $region24: #{spatial_self_attention.2} parent=5 // pred_fallthru
      _
    %p282 = scmp.le.s32.totalorder 1, %s14
    %p283 = scmp.lt.s32.totalorder %s14, 3
    %p284 = pnand %p282, %p283
    %p285 = pneg %p284
    // Predicated region
    $region37: #{spatial_self_attention.2} parent=5 // pred_check
      _
    $region38: #{spatial_self_attention.2} parent=5 // pred_check_branch
      %287 = sbr.rel (%p284) target = $region40
    $region39: #{spatial_self_attention.2} parent=5 // pred_region
      %s288 = ssub.s32 %s14, 1
      %s289 = smul.u32 8, %s24
      %p290 = scmp.lt.s32.totalorder %s23, 1
      %s291 = scalar_select %p290, %s23, 1
      %p292 = scmp.lt.s32.totalorder %s289, 7
      %s293 = scalar_select %p292, %s289, 7
      %s294 = smul.addr %s291, 8
      %s295 = sadd.s32 %s293, %s294
      %s296 = smul.addr %s295, 8
      %s297 = scalar_lea.vmem %s0, %s296
      %p298 = pneg %p54
      %p299 = pneg %p51
      %p300 = scmp.lt.s32.totalorder %s23, 1
      %s301 = scalar_select %p300, %s23, 1
      %s302 = scalar_lea.vmem %s1, %s301
      %p303 = pneg %p80
      %p304 = pneg %p77
      %p305 = scmp.lt.s32.totalorder %s23, 1
      %s306 = scalar_select %p305, %s23, 1
      %s307 = scalar_lea.vmem %s2, %s306
      %p308 = pneg %p106
      %p309 = pneg %p103
      %p310 = pneg %p127
      %p311 = pneg %p124
      %p312 = pneg %p148
      %p313 = pneg %p145
      %p314 = pneg %p176
      %p315 = pneg %p173
      %s316 = smul.u32 8, %s24
      %p317 = scmp.lt.s32.totalorder %s23, 1
      %s318 = scalar_select %p317, %s23, 1
      %p319 = scmp.lt.s32.totalorder %s316, 7
      %s320 = scalar_select %p319, %s316, 7
      %s321 = smul.addr %s318, 8
      %s322 = sadd.s32 %s320, %s321
      %s323 = smul.addr %s322, 8
      %s324 = scalar_lea.vmem %s5, %s323
      %p325 = pneg %p204
      %p326 = pneg %p201
      %s327 = smul.u32 8, %s24
      %p328 = scmp.lt.s32.totalorder %s23, 1
      %s329 = scalar_select %p328, %s23, 1
      %p330 = scmp.lt.s32.totalorder %s327, 7
      %s331 = scalar_select %p330, %s327, 7
      %s332 = smul.addr %s329, 8
      %s333 = sadd.s32 %s331, %s332
      %s334 = smul.addr %s333, 8
      %s335 = scalar_lea.vmem %s6, %s334
      %p336 = pneg %p232
      %p337 = pneg %p229
      %s338 = smul.u32 8, %s24
      %p339 = scmp.lt.s32.totalorder %s23, 1
      %s340 = scalar_select %p339, %s23, 1
      %p341 = scmp.lt.s32.totalorder %s338, 7
      %s342 = scalar_select %p341, %s338, 7
      %s343 = smul.addr %s340, 8
      %s344 = sadd.s32 %s342, %s343
      %s345 = smul.addr %s344, 8
      %s346 = scalar_lea.vmem %s7, %s345
      %s347 = smul.u32 8, %s24
      %p348 = scmp.lt.s32.totalorder %s23, 1
      %s349 = scalar_select %p348, %s23, 1
      %p350 = scmp.lt.s32.totalorder %s347, 7
      %s351 = scalar_select %p350, %s347, 7
      %s352 = smul.addr %s349, 8
      %s353 = sadd.s32 %s351, %s352
      %s354 = smul.addr %s353, 8
      %s355 = scalar_lea.vmem %s0, %s354
      %s356 = smul.u32 8, %s24
      %p357 = scmp.lt.s32.totalorder %s23, 1
      %s358 = scalar_select %p357, %s23, 1
      %s359 = scalar_lea.vmem %s1, %s358
      %p360 = scmp.lt.s32.totalorder %s23, 1
      %s361 = scalar_select %p360, %s23, 1
      %s362 = scalar_lea.vmem %s2, %s361
      %s363 = smul.u32 8, %s24
      %p364 = scmp.lt.s32.totalorder %s23, 1
      %s365 = scalar_select %p364, %s23, 1
      %p366 = scmp.lt.s32.totalorder %s363, 7
      %s367 = scalar_select %p366, %s363, 7
      %s368 = smul.addr %s365, 8
      %s369 = sadd.s32 %s367, %s368
      %s370 = smul.addr %s369, 8
      %s371 = scalar_lea.vmem %s5, %s370
      %s372 = smul.u32 8, %s24
      %s373 = smul.u32 8, %s24
      %p374 = scmp.lt.s32.totalorder %s23, 1
      %s375 = scalar_select %p374, %s23, 1
      %p376 = scmp.lt.s32.totalorder %s373, 7
      %s377 = scalar_select %p376, %s373, 7
      %s378 = smul.addr %s375, 8
      %s379 = sadd.s32 %s377, %s378
      %s380 = smul.addr %s379, 8
      %s381 = scalar_lea.vmem %s6, %s380
      %s382 = smul.u32 8, %s24
      %s383 = smul.u32 8, %s24
      %p384 = scmp.lt.s32.totalorder %s23, 1
      %s385 = scalar_select %p384, %s23, 1
      %p386 = scmp.lt.s32.totalorder %s383, 7
      %s387 = scalar_select %p386, %s383, 7
      %s388 = smul.addr %s385, 8
      %s389 = sadd.s32 %s387, %s388
      %s390 = smul.addr %s389, 8
      %s391 = scalar_lea.vmem %s7, %s390
      %s392 = smul.u32 8, %s24
      %v393 = vld [vmem:[%s355] sm:$0xff]
      %v394 = vld [vmem:[%s355 + $0x8] sm:$0xff]
      %v395 = vld [vmem:[%s355 + $0x10] sm:$0xff]
      %v396 = vld [vmem:[%s355 + $0x18] sm:$0xff]
      %v397 = vld [vmem:[%s355 + $0x20] sm:$0xff]
      %v398 = vld [vmem:[%s355 + $0x28] sm:$0xff]
      %v399 = vld [vmem:[%s355 + $0x30] sm:$0xff]
      %v400 = vld [vmem:[%s355 + $0x38] sm:$0xff]
      %v401 = vld [vmem:[%s359] sm:$0x1]
      %v403 = vperm.slane %v401, 0
      %v405 = vmul.f32 %v393, %v403
      %v406 = vmul.f32 %v394, %v403
      %v407 = vmul.f32 %v395, %v403
      %v408 = vmul.f32 %v396, %v403
      %v409 = vmul.f32 %v397, %v403
      %v410 = vmul.f32 %v398, %v403
      %v411 = vmul.f32 %v399, %v403
      %v412 = vmul.f32 %v400, %v403
      %v413 = vld [vmem:[%s362] sm:$0x1]
      %v415 = vperm.slane %v413, 0
      %v417 = vadd.f32 %v405, %v415
      %v418 = vadd.f32 %v406, %v415
      %v419 = vadd.f32 %v407, %v415
      %v420 = vadd.f32 %v408, %v415
      %v421 = vadd.f32 %v409, %v415
      %v422 = vadd.f32 %v410, %v415
      %v423 = vadd.f32 %v411, %v415
      %v424 = vadd.f32 %v412, %v415
      %v425 = vld [vmem:[%s3] sm:$0xff]
      %v426 = vld [vmem:[%s3 + $0x8] sm:$0xff]
      %v427 = vld [vmem:[%s3 + $0x10] sm:$0xff]
      %v428 = vld [vmem:[%s3 + $0x18] sm:$0xff]
      %v429 = vld [vmem:[%s4] sm:$0x1]
      %v431 = vperm.slane %v429, 0
      %vm433 = vcmask 261120
      %v435 = vsel %vm433, %v417, 0
      %v438 = vsel %vm433, %v418, 0
      %v441 = vsel %vm433, %v419, 0
      %v444 = vsel %vm433, %v420, 0
      %v447 = vsel %vm433, %v421, 0
      %v450 = vsel %vm433, %v422, 0
      %v453 = vsel %vm433, %v423, 0
      %v456 = vsel %vm433, %v424, 0
      %458 = vmatpush.msra.mxu0 0.0
      %459 = vmatpush.msra.mxu0 0.0
      %460 = vmatpush.msra.mxu0 0.0
      %461 = vmatpush.msra.mxu0 0.0
      %462 = vmatpush.msra.mxu0 0.0
      %463 = vmatpush.msra.mxu0 0.0
      %464 = vmatpush.msra.mxu0 0.0
      %465 = vmatpush.msra.mxu0 0.0
      %466 = vmatpush.msra.mxu0 0.0
      %467 = vmatpush.msra.mxu0 0.0
      %468 = vmatpush.msra.mxu0 0.0
      %469 = vmatpush.msra.mxu0 0.0
      %470 = vmatpush.msra.mxu0 %v428
      %471 = vmatpush.msra.mxu0 %v427
      %472 = vmatpush.msra.mxu0 %v426
      %473 = vmatpush.msra.mxu0 %v425
      %474 = vmatmul.f32.gmra.mxu0 %v435
      %v475 = vpop.f32.mrf.mxu0
      %v476 = vadd.f32 %v431, %v475
      %477 = vmatmul.f32.gmra.mxu0 %v438
      %v478 = vpop.f32.mrf.mxu0
      %v479 = vadd.f32 %v431, %v478
      %480 = vmatmul.f32.gmra.mxu0 %v441
      %v481 = vpop.f32.mrf.mxu0
      %v482 = vadd.f32 %v431, %v481
      %483 = vmatmul.f32.gmra.mxu0 %v444
      %v484 = vpop.f32.mrf.mxu0
      %v485 = vadd.f32 %v431, %v484
      %486 = vmatmul.f32.gmra.mxu0 %v447
      %v487 = vpop.f32.mrf.mxu0
      %v488 = vadd.f32 %v431, %v487
      %489 = vmatmul.f32.gmra.mxu0 %v450
      %v490 = vpop.f32.mrf.mxu0
      %v491 = vadd.f32 %v431, %v490
      %492 = vmatmul.f32.gmra.mxu0 %v453
      %v493 = vpop.f32.mrf.mxu0
      %v494 = vadd.f32 %v431, %v493
      %495 = vmatmul.f32.gmra.mxu0 %v456
      %v496 = vpop.f32.mrf.mxu0
      %v497 = vadd.f32 %v431, %v496
      %498 = vdwg.mxu0
      %499 = vst.msk [vmem:[%s371] sm:$0xff] %vm433, %v476
      %500 = vst.msk [vmem:[%s371 + $0x8] sm:$0xff] %vm433, %v479
      %501 = vst.msk [vmem:[%s371 + $0x10] sm:$0xff] %vm433, %v482
      %502 = vst.msk [vmem:[%s371 + $0x18] sm:$0xff] %vm433, %v485
      %503 = vst.msk [vmem:[%s371 + $0x20] sm:$0xff] %vm433, %v488
      %504 = vst.msk [vmem:[%s371 + $0x28] sm:$0xff] %vm433, %v491
      %505 = vst.msk [vmem:[%s371 + $0x30] sm:$0xff] %vm433, %v494
      %506 = vst.msk [vmem:[%s371 + $0x38] sm:$0xff] %vm433, %v497
      %515 = vrot.lane.b32.xlu0 %v476, 96
      %v516 = vpop.permute.xlu0 %515
      %517 = vrot.lane.b32.xlu0 %v479, 96
      %v518 = vpop.permute.xlu0 %517
      %519 = vrot.lane.b32.xlu0 %v482, 96
      %v520 = vpop.permute.xlu0 %519
      %521 = vrot.lane.b32.xlu0 %v485, 96
      %v522 = vpop.permute.xlu0 %521
      %523 = vrot.lane.b32.xlu0 %v488, 96
      %v524 = vpop.permute.xlu0 %523
      %525 = vrot.lane.b32.xlu0 %v491, 96
      %v526 = vpop.permute.xlu0 %525
      %527 = vrot.lane.b32.xlu0 %v494, 96
      %v528 = vpop.permute.xlu0 %527
      %529 = vrot.lane.b32.xlu0 %v497, 96
      %v530 = vpop.permute.xlu0 %529
      %539 = vst.msk [vmem:[%s381] sm:$0xff] %vm433, %v516
      %540 = vst.msk [vmem:[%s381 + $0x8] sm:$0xff] %vm433, %v518
      %541 = vst.msk [vmem:[%s381 + $0x10] sm:$0xff] %vm433, %v520
      %542 = vst.msk [vmem:[%s381 + $0x18] sm:$0xff] %vm433, %v522
      %543 = vst.msk [vmem:[%s381 + $0x20] sm:$0xff] %vm433, %v524
      %544 = vst.msk [vmem:[%s381 + $0x28] sm:$0xff] %vm433, %v526
      %545 = vst.msk [vmem:[%s381 + $0x30] sm:$0xff] %vm433, %v528
      %546 = vst.msk [vmem:[%s381 + $0x38] sm:$0xff] %vm433, %v530
      %547 = vrot.lane.b32.xlu0 %v476, 64
      %v548 = vpop.permute.xlu0 %547
      %549 = vrot.lane.b32.xlu0 %v479, 64
      %v550 = vpop.permute.xlu0 %549
      %551 = vrot.lane.b32.xlu0 %v482, 64
      %v552 = vpop.permute.xlu0 %551
      %553 = vrot.lane.b32.xlu0 %v485, 64
      %v554 = vpop.permute.xlu0 %553
      %555 = vrot.lane.b32.xlu0 %v488, 64
      %v556 = vpop.permute.xlu0 %555
      %557 = vrot.lane.b32.xlu0 %v491, 64
      %v558 = vpop.permute.xlu0 %557
      %559 = vrot.lane.b32.xlu0 %v494, 64
      %v560 = vpop.permute.xlu0 %559
      %561 = vrot.lane.b32.xlu0 %v497, 64
      %v562 = vpop.permute.xlu0 %561
      %571 = vst.msk [vmem:[%s391] sm:$0xff] %vm433, %v548
      %572 = vst.msk [vmem:[%s391 + $0x8] sm:$0xff] %vm433, %v550
      %573 = vst.msk [vmem:[%s391 + $0x10] sm:$0xff] %vm433, %v552
      %574 = vst.msk [vmem:[%s391 + $0x18] sm:$0xff] %vm433, %v554
      %575 = vst.msk [vmem:[%s391 + $0x20] sm:$0xff] %vm433, %v556
      %576 = vst.msk [vmem:[%s391 + $0x28] sm:$0xff] %vm433, %v558
      %577 = vst.msk [vmem:[%s391 + $0x30] sm:$0xff] %vm433, %v560
      %578 = vst.msk [vmem:[%s391 + $0x38] sm:$0xff] %vm433, %v562
      %s579 = smul.u32 8, %s24
      %p580 = scmp.lt.s32.totalorder %s23, 1
      %s581 = scalar_select %p580, %s23, 1
      %p582 = scmp.lt.s32.totalorder %s579, 7
      %s583 = scalar_select %p582, %s579, 7
      %s584 = smul.addr %s581, 8
      %s585 = sadd.s32 %s583, %s584
      %s586 = smul.addr %s585, 8
      %s587 = scalar_lea.vmem %s5, %s586
      %s588 = smul.u32 8, %s24
      %p589 = scmp.lt.s32.totalorder %s23, 1
      %s590 = scalar_select %p589, %s23, 1
      %p591 = scmp.lt.s32.totalorder %s588, 7
      %s592 = scalar_select %p591, %s588, 7
      %s593 = smul.addr %s590, 8
      %s594 = sadd.s32 %s592, %s593
      %s595 = smul.addr %s594, 8
      %s596 = scalar_lea.vmem %s6, %s595
      %s597 = smul.u32 8, %s24
      %p598 = scmp.lt.s32.totalorder %s23, 1
      %s599 = scalar_select %p598, %s23, 1
      %p600 = scmp.lt.s32.totalorder %s597, 7
      %s601 = scalar_select %p600, %s597, 7
      %s602 = smul.addr %s599, 8
      %s603 = sadd.s32 %s601, %s602
      %s604 = smul.addr %s603, 8
      %s605 = scalar_lea.vmem %s7, %s604
      // Predicated region
      $region41: #{spatial_self_attention.2} parent=39 // pred_check
        %p606 = pneg %p173
      $region42: #{spatial_self_attention.2} parent=39 // pred_check_branch
        %608 = sbr.rel (%p606) target = $region44
      $region43: #{spatial_self_attention.2} parent=39 // pred_region
        %s609 = smul.u32 8, %s24
      $region44: #{spatial_self_attention.2} parent=39 // pred_fallthru
        _
      // Predicated region
      $region45: #{spatial_self_attention.2} parent=39 // pred_check
        %p610 = pneg %p201
      $region46: #{spatial_self_attention.2} parent=39 // pred_check_branch
        %612 = sbr.rel (%p610) target = $region48
      $region47: #{spatial_self_attention.2} parent=39 // pred_region
        %s613 = smul.u32 8, %s24
      $region48: #{spatial_self_attention.2} parent=39 // pred_fallthru
        _
      // Predicated region
      $region49: #{spatial_self_attention.2} parent=39 // pred_check
        %p614 = pneg %p229
      $region50: #{spatial_self_attention.2} parent=39 // pred_check_branch
        %616 = sbr.rel (%p614) target = $region52
      $region51: #{spatial_self_attention.2} parent=39 // pred_region
        %s617 = smul.u32 8, %s24
      $region52: #{spatial_self_attention.2} parent=39 // pred_fallthru
        _
    $region40: #{spatial_self_attention.2} parent=5 // pred_fallthru
      _
    %p618 = scmp.le.s32.totalorder 2, %s14
    // Predicated region
    $region53: #{spatial_self_attention.2} parent=5 // pred_check
      %p619 = pneg %p618
    $region54: #{spatial_self_attention.2} parent=5 // pred_check_branch
      %621 = sbr.rel (%p619) target = $region56
    $region55: #{spatial_self_attention.2} parent=5 // pred_region
      %s622 = ssub.s32 %s14, 2
      // Predicated region
      $region57: #{spatial_self_attention.2} parent=55 // pred_check
        %p623 = pneg %p179
      $region58: #{spatial_self_attention.2} parent=55 // pred_check_branch
        %625 = sbr.rel (%p623) target = $region60
      $region59: #{spatial_self_attention.2} parent=55 // pred_region
        %s626 = smul.u32 8, %s26
        %p627 = scmp.lt.s32.totalorder %s25, 1
        %s628 = scalar_select %p627, %s25, 1
        %p629 = scmp.lt.s32.totalorder %s626, 7
        %s630 = scalar_select %p629, %s626, 7
        %s631 = smul.addr %s628, 8
        %s632 = sadd.s32 %s630, %s631
        %s633 = smul.addr %s632, 8
        %s634 = scalar_lea.vmem %s5, %s633
      $region60: #{spatial_self_attention.2} parent=55 // pred_fallthru
        _
      // Predicated region
      $region61: #{spatial_self_attention.2} parent=55 // pred_check
        %p635 = pneg %p207
      $region62: #{spatial_self_attention.2} parent=55 // pred_check_branch
        %637 = sbr.rel (%p635) target = $region64
      $region63: #{spatial_self_attention.2} parent=55 // pred_region
        %s638 = smul.u32 8, %s26
        %p639 = scmp.lt.s32.totalorder %s25, 1
        %s640 = scalar_select %p639, %s25, 1
        %p641 = scmp.lt.s32.totalorder %s638, 7
        %s642 = scalar_select %p641, %s638, 7
        %s643 = smul.addr %s640, 8
        %s644 = sadd.s32 %s642, %s643
        %s645 = smul.addr %s644, 8
        %s646 = scalar_lea.vmem %s6, %s645
      $region64: #{spatial_self_attention.2} parent=55 // pred_fallthru
        _
      // Predicated region
      $region65: #{spatial_self_attention.2} parent=55 // pred_check
        %p647 = pneg %p235
      $region66: #{spatial_self_attention.2} parent=55 // pred_check_branch
        %649 = sbr.rel (%p647) target = $region68
      $region67: #{spatial_self_attention.2} parent=55 // pred_region
        %s650 = smul.u32 8, %s26
        %p651 = scmp.lt.s32.totalorder %s25, 1
        %s652 = scalar_select %p651, %s25, 1
        %p653 = scmp.lt.s32.totalorder %s650, 7
        %s654 = scalar_select %p653, %s650, 7
        %s655 = smul.addr %s652, 8
        %s656 = sadd.s32 %s654, %s655
        %s657 = smul.addr %s656, 8
        %s658 = scalar_lea.vmem %s7, %s657
      $region68: #{spatial_self_attention.2} parent=55 // pred_fallthru
        _
    $region56: #{spatial_self_attention.2} parent=5 // pred_fallthru
      _
  $region6: #{spatial_self_attention.2} parent=0 // loop_footer
    %s18 = sadd.s32 1, %s14
  $region7: #{spatial_self_attention.2} parent=0 // loop_footer_branch
    %13 = sbr.rel target = $region3
  $region8: #{spatial_self_attention.2} parent=0 // loop_exit
    _

// kernel: spatial_self_attention.3
$region0: #{spatial_self_attention.3}
  #allocation0 [shape = 'u32[]', space=smem, size = 0x4, offset = 0x4, fixed_abs, tag = 'smem constant byte address 0x4 - core index']
  #allocation1 [shape = 'u32[72,128]{1,0:T(1,128)}', space=vmem, size = 0x9000, scoped, tag = 'internal scratch']
  #allocation2 [shape = 'f32[64,1]{1,0:T(8,128)}', space=vmem, size = 0x8000, scoped, tag = 'scratch operand']
  #allocation3 [shape = 'f32[64,1]{1,0:T(8,128)}', space=vmem, size = 0x8000, scoped, tag = 'scratch operand']
  #allocation4 [shape = 'f32[64,32]{1,0:T(8,128)}', space=vmem, size = 0x8000, scoped, tag = 'scratch operand']
  %s0 = inlined_call_operand.vmem [shape: f32[2,64,32], index: 0, kind: input, shape index: {}]
  %s1 = inlined_call_operand.vmem [shape: f32[2,64,32], index: 1, kind: input, shape index: {}]
  %s2 = inlined_call_operand.vmem [shape: f32[2,64,32], index: 2, kind: input, shape index: {}]
  %s3 = inlined_call_operand.vmem [shape: f32[2,64,32], index: 3, kind: input, shape index: {}, may-alias: {3,6}]
  %s4 = inlined_call_operand.vmem [shape: f32[32,32], index: 4, kind: input, shape index: {}]
  %s5 = inlined_call_operand.vmem [shape: f32[1,32], index: 5, kind: input, shape index: {}]
  %s6 = inlined_call_operand.vmem [shape: f32[2,64,32], index: 6, kind: output, shape index: {}, may-alias: {3,6}]
  %s7 = sld [smem:[#allocation0]]
  $region57: #{spatial_self_attention.3} parent=0
    _
  %s9 = ssub.s32 1, %s7
  %s10 = scalar_select 0, %s9, %s7
  loop: start=0, step=1, limit=4
  $region2: #{spatial_self_attention.3} parent=0 // loop_pre_header
    _
  $region3: #{spatial_self_attention.3} parent=0 // loop_header
    %s12 = sphi 0, %s16
    %p13 = scmp.ge.s32.totalorder %s12, 4
    %s19 = sphi 0, %s31
    %s20 = sphi 0, %s27
    %s21 = sphi 0, %s19
    %s22 = sphi 0, %s20
    %s23 = sphi 0, %s21
    %s24 = sphi 0, %s22
    %s36 = sphi 0, %s38
    %s39 = sphi 0, %s36
    %s40 = sphi 0, %s39
    %s56 = sphi 0, %s40
    %s62 = sphi 0, %s64
    %s65 = sphi 0, %s62
    %s66 = sphi 0, %s65
    %s82 = sphi 0, %s66
    %s88 = sphi 0, %s90
    %s91 = sphi 0, %s88
    %s92 = sphi 0, %s91
    %s108 = sphi 0, %s92
    %s116 = sphi 0, %s118
    %s119 = sphi 0, %s116
    %s120 = sphi 0, %s119
    %s136 = sphi 0, %s120
    %s140 = sphi 0, %s140
    %s142 = sphi 0, %s140
    %s143 = sphi 0, %s142
    %s157 = sphi 0, %s143
    %s161 = sphi 0, %s161
    %s163 = sphi 0, %s161
    %s164 = sphi 0, %s163
    %s178 = sphi 0, %s164
    %s186 = sphi 0, %s188
    %s189 = sphi 0, %s186
    %s190 = sphi 0, %s189
    %s206 = sphi 0, %s190
  $region4: #{spatial_self_attention.3} parent=0 // loop_header_branch
    %15 = sbr.rel (%p13) target = $region8
  $region5: #{spatial_self_attention.3} parent=0 // loop_body
    %s17 = ssub.s32 %s12, 1
    %s18 = ssub.s32 %s12, 2
    %s25 = sadd.s32 1, %s20
    %p26 = scmp.ge.s32.totalorder %s25, 1
    %s27 = scalar_select %p26, 0, %s25
    %s28 = sadd.s32 1, %s19
    %s29 = scalar_select %p26, %s28, %s19
    %p30 = scmp.ge.s32.totalorder %s29, 2
    %s31 = scalar_select %p30, 0, %s29
    %s32 = ssub.s32 %s19, %s31
    %s33 = ssub.s32 %s20, %s27
    %s34 = sor.u32 %s32, %s33
    %p35 = scmp.eq.s32.totalorder %s34, 0
    %s37 = sadd.s32 %s36, 1
    %s38 = scalar_select %p35, %s36, %s37
    %p41 = pneg %p35
    %p42 = scmp.eq.s32.totalorder %s12, 1
    %p43 = por %p41, %p42
    %p44 = scmp.ne.s32.totalorder %s36, %s39
    %p45 = scmp.eq.s32.totalorder %s12, 0
    %p46 = por %p44, %p45
    %p47 = scmp.ne.s32.totalorder %s36, %s39
    %p48 = scmp.eq.s32.totalorder %s17, 1
    %p49 = por %p47, %p48
    %p50 = scmp.ne.s32.totalorder %s39, %s40
    %p51 = scmp.eq.s32.totalorder %s17, 0
    %p52 = por %p50, %p51
    %p53 = scmp.ne.s32.totalorder %s39, %s40
    %p54 = scmp.eq.s32.totalorder %s18, 1
    %p55 = por %p53, %p54
    %p57 = scmp.ne.s32.totalorder %s40, %s56
    %p58 = scmp.eq.s32.totalorder %s18, 0
    %p59 = por %p57, %p58
    %s60 = ssub.s32 %s19, %s31
    %p61 = scmp.eq.s32.totalorder %s60, 0
    %s63 = sadd.s32 %s62, 1
    %s64 = scalar_select %p61, %s62, %s63
    %p67 = pneg %p61
    %p68 = scmp.eq.s32.totalorder %s12, 1
    %p69 = por %p67, %p68
    %p70 = scmp.ne.s32.totalorder %s62, %s65
    %p71 = scmp.eq.s32.totalorder %s12, 0
    %p72 = por %p70, %p71
    %p73 = scmp.ne.s32.totalorder %s62, %s65
    %p74 = scmp.eq.s32.totalorder %s17, 1
    %p75 = por %p73, %p74
    %p76 = scmp.ne.s32.totalorder %s65, %s66
    %p77 = scmp.eq.s32.totalorder %s17, 0
    %p78 = por %p76, %p77
    %p79 = scmp.ne.s32.totalorder %s65, %s66
    %p80 = scmp.eq.s32.totalorder %s18, 1
    %p81 = por %p79, %p80
    %p83 = scmp.ne.s32.totalorder %s66, %s82
    %p84 = scmp.eq.s32.totalorder %s18, 0
    %p85 = por %p83, %p84
    %s86 = ssub.s32 %s19, %s31
    %p87 = scmp.eq.s32.totalorder %s86, 0
    %s89 = sadd.s32 %s88, 1
    %s90 = scalar_select %p87, %s88, %s89
    %p93 = pneg %p87
    %p94 = scmp.eq.s32.totalorder %s12, 1
    %p95 = por %p93, %p94
    %p96 = scmp.ne.s32.totalorder %s88, %s91
    %p97 = scmp.eq.s32.totalorder %s12, 0
    %p98 = por %p96, %p97
    %p99 = scmp.ne.s32.totalorder %s88, %s91
    %p100 = scmp.eq.s32.totalorder %s17, 1
    %p101 = por %p99, %p100
    %p102 = scmp.ne.s32.totalorder %s91, %s92
    %p103 = scmp.eq.s32.totalorder %s17, 0
    %p104 = por %p102, %p103
    %p105 = scmp.ne.s32.totalorder %s91, %s92
    %p106 = scmp.eq.s32.totalorder %s18, 1
    %p107 = por %p105, %p106
    %p109 = scmp.ne.s32.totalorder %s92, %s108
    %p110 = scmp.eq.s32.totalorder %s18, 0
    %p111 = por %p109, %p110
    %s112 = ssub.s32 %s19, %s31
    %s113 = ssub.s32 %s20, %s27
    %s114 = sor.u32 %s112, %s113
    %p115 = scmp.eq.s32.totalorder %s114, 0
    %s117 = sadd.s32 %s116, 1
    %s118 = scalar_select %p115, %s116, %s117
    %p121 = pneg %p115
    %p122 = scmp.eq.s32.totalorder %s12, 1
    %p123 = por %p121, %p122
    %p124 = scmp.ne.s32.totalorder %s116, %s119
    %p125 = scmp.eq.s32.totalorder %s12, 0
    %p126 = por %p124, %p125
    %p127 = scmp.ne.s32.totalorder %s116, %s119
    %p128 = scmp.eq.s32.totalorder %s17, 1
    %p129 = por %p127, %p128
    %p130 = scmp.ne.s32.totalorder %s119, %s120
    %p131 = scmp.eq.s32.totalorder %s17, 0
    %p132 = por %p130, %p131
    %p133 = scmp.ne.s32.totalorder %s119, %s120
    %p134 = scmp.eq.s32.totalorder %s18, 1
    %p135 = por %p133, %p134
    %p137 = scmp.ne.s32.totalorder %s120, %s136
    %p138 = scmp.eq.s32.totalorder %s18, 0
    %p139 = por %p137, %p138
    %s141 = sadd.s32 %s140, 1
    %p144 = scmp.eq.s32.totalorder %s12, 1
    %p145 = scmp.ne.s32.totalorder %s140, %s142
    %p146 = scmp.eq.s32.totalorder %s12, 0
    %p147 = por %p145, %p146
    %p148 = scmp.ne.s32.totalorder %s140, %s142
    %p149 = scmp.eq.s32.totalorder %s17, 1
    %p150 = por %p148, %p149
    %p151 = scmp.ne.s32.totalorder %s142, %s143
    %p152 = scmp.eq.s32.totalorder %s17, 0
    %p153 = por %p151, %p152
    %p154 = scmp.ne.s32.totalorder %s142, %s143
    %p155 = scmp.eq.s32.totalorder %s18, 1
    %p156 = por %p154, %p155
    %p158 = scmp.ne.s32.totalorder %s143, %s157
    %p159 = scmp.eq.s32.totalorder %s18, 0
    %p160 = por %p158, %p159
    %s162 = sadd.s32 %s161, 1
    %p165 = scmp.eq.s32.totalorder %s12, 1
    %p166 = scmp.ne.s32.totalorder %s161, %s163
    %p167 = scmp.eq.s32.totalorder %s12, 0
    %p168 = por %p166, %p167
    %p169 = scmp.ne.s32.totalorder %s161, %s163
    %p170 = scmp.eq.s32.totalorder %s17, 1
    %p171 = por %p169, %p170
    %p172 = scmp.ne.s32.totalorder %s163, %s164
    %p173 = scmp.eq.s32.totalorder %s17, 0
    %p174 = por %p172, %p173
    %p175 = scmp.ne.s32.totalorder %s163, %s164
    %p176 = scmp.eq.s32.totalorder %s18, 1
    %p177 = por %p175, %p176
    %p179 = scmp.ne.s32.totalorder %s164, %s178
    %p180 = scmp.eq.s32.totalorder %s18, 0
    %p181 = por %p179, %p180
    %s182 = ssub.s32 %s19, %s31
    %s183 = ssub.s32 %s20, %s27
    %s184 = sor.u32 %s182, %s183
    %p185 = scmp.eq.s32.totalorder %s184, 0
    %s187 = sadd.s32 %s186, 1
    %s188 = scalar_select %p185, %s186, %s187
    %p191 = pneg %p185
    %p192 = scmp.eq.s32.totalorder %s12, 1
    %p193 = por %p191, %p192
    %p194 = scmp.ne.s32.totalorder %s186, %s189
    %p195 = scmp.eq.s32.totalorder %s12, 0
    %p196 = por %p194, %p195
    %p197 = scmp.ne.s32.totalorder %s186, %s189
    %p198 = scmp.eq.s32.totalorder %s17, 1
    %p199 = por %p197, %p198
    %p200 = scmp.ne.s32.totalorder %s189, %s190
    %p201 = scmp.eq.s32.totalorder %s17, 0
    %p202 = por %p200, %p201
    %p203 = scmp.ne.s32.totalorder %s189, %s190
    %p204 = scmp.eq.s32.totalorder %s18, 1
    %p205 = por %p203, %p204
    %p207 = scmp.ne.s32.totalorder %s190, %s206
    %p208 = scmp.eq.s32.totalorder %s18, 0
    %p209 = por %p207, %p208
    %p210 = scmp.le.s32.totalorder 1, %s12
    %p211 = scmp.lt.s32.totalorder %s12, 3
    %p212 = pnand %p210, %p211
    %p213 = pneg %p212
    // Predicated region
    $region9: #{spatial_self_attention.3} parent=5 // pred_check
      _
    $region10: #{spatial_self_attention.3} parent=5 // pred_check_branch
      %215 = sbr.rel (%p212) target = $region12
    $region11: #{spatial_self_attention.3} parent=5 // pred_region
      %s216 = ssub.s32 %s12, 1
      // Predicated region
      $region13: #{spatial_self_attention.3} parent=11 // pred_check
        %p217 = pneg %p153
      $region14: #{spatial_self_attention.3} parent=11 // pred_check_branch
        %219 = sbr.rel (%p217) target = $region16
      $region15: #{spatial_self_attention.3} parent=11 // pred_region
        _
      $region16: #{spatial_self_attention.3} parent=11 // pred_fallthru
        _
      // Predicated region
      $region17: #{spatial_self_attention.3} parent=11 // pred_check
        %p220 = pneg %p174
      $region18: #{spatial_self_attention.3} parent=11 // pred_check_branch
        %222 = sbr.rel (%p220) target = $region20
      $region19: #{spatial_self_attention.3} parent=11 // pred_region
        _
      $region20: #{spatial_self_attention.3} parent=11 // pred_fallthru
        _
    $region12: #{spatial_self_attention.3} parent=5 // pred_fallthru
      _
    %p223 = scmp.lt.s32.totalorder %s12, 2
    // Predicated region
    $region21: #{spatial_self_attention.3} parent=5 // pred_check
      %p224 = pneg %p223
    $region22: #{spatial_self_attention.3} parent=5 // pred_check_branch
      %226 = sbr.rel (%p224) target = $region24
    $region23: #{spatial_self_attention.3} parent=5 // pred_region
      // Predicated region
      $region25: #{spatial_self_attention.3} parent=23 // pred_check
        %p227 = pneg %p46
      $region26: #{spatial_self_attention.3} parent=23 // pred_check_branch
        %229 = sbr.rel (%p227) target = $region28
      $region27: #{spatial_self_attention.3} parent=23 // pred_region
        %s230 = smul.u32 8, %s20
        %p231 = scmp.lt.s32.totalorder %s19, 1
        %s232 = scalar_select %p231, %s19, 1
        %p233 = scmp.lt.s32.totalorder %s230, 7
        %s234 = scalar_select %p233, %s230, 7
        %s235 = smul.addr %s232, 8
        %s236 = sadd.s32 %s234, %s235
        %s237 = smul.addr %s236, 8
        %s238 = scalar_lea.vmem %s0, %s237
        %s239 = smul.u32 8, %s20
      $region28: #{spatial_self_attention.3} parent=23 // pred_fallthru
        _
      // Predicated region
      $region29: #{spatial_self_attention.3} parent=23 // pred_check
        %p240 = pneg %p72
      $region30: #{spatial_self_attention.3} parent=23 // pred_check_branch
        %242 = sbr.rel (%p240) target = $region32
      $region31: #{spatial_self_attention.3} parent=23 // pred_region
        %p243 = scmp.lt.s32.totalorder %s19, 1
        %s244 = scalar_select %p243, %s19, 1
        %s245 = smul.addr %s244, 8
        %s246 = smul.addr %s245, 8
        %s247 = scalar_lea.vmem %s1, %s246
      $region32: #{spatial_self_attention.3} parent=23 // pred_fallthru
        _
      // Predicated region
      $region33: #{spatial_self_attention.3} parent=23 // pred_check
        %p248 = pneg %p98
      $region34: #{spatial_self_attention.3} parent=23 // pred_check_branch
        %250 = sbr.rel (%p248) target = $region36
      $region35: #{spatial_self_attention.3} parent=23 // pred_region
        %p251 = scmp.lt.s32.totalorder %s19, 1
        %s252 = scalar_select %p251, %s19, 1
        %s253 = smul.addr %s252, 8
        %s254 = smul.addr %s253, 8
        %s255 = scalar_lea.vmem %s2, %s254
      $region36: #{spatial_self_attention.3} parent=23 // pred_fallthru
        _
      // Predicated region
      $region37: #{spatial_self_attention.3} parent=23 // pred_check
        %p256 = pneg %p126
      $region38: #{spatial_self_attention.3} parent=23 // pred_check_branch
        %258 = sbr.rel (%p256) target = $region40
      $region39: #{spatial_self_attention.3} parent=23 // pred_region
        %s259 = smul.u32 8, %s20
        %p260 = scmp.lt.s32.totalorder %s19, 1
        %s261 = scalar_select %p260, %s19, 1
        %p262 = scmp.lt.s32.totalorder %s259, 7
        %s263 = scalar_select %p262, %s259, 7
        %s264 = smul.addr %s261, 8
        %s265 = sadd.s32 %s263, %s264
        %s266 = smul.addr %s265, 8
        %s267 = scalar_lea.vmem %s3, %s266
        %s268 = smul.u32 8, %s20
      $region40: #{spatial_self_attention.3} parent=23 // pred_fallthru
        _
    $region24: #{spatial_self_attention.3} parent=5 // pred_fallthru
      _
    %p269 = scmp.le.s32.totalorder 1, %s12
    %p270 = scmp.lt.s32.totalorder %s12, 3
    %p271 = pnand %p269, %p270
    %p272 = pneg %p271
    // Predicated region
    $region41: #{spatial_self_attention.3} parent=5 // pred_check
      _
    $region42: #{spatial_self_attention.3} parent=5 // pred_check_branch
      %274 = sbr.rel (%p271) target = $region44
    $region43: #{spatial_self_attention.3} parent=5 // pred_region
      %s275 = ssub.s32 %s12, 1
      %s276 = smul.u32 8, %s22
      %p277 = scmp.lt.s32.totalorder %s21, 1
      %s278 = scalar_select %p277, %s21, 1
      %p279 = scmp.lt.s32.totalorder %s276, 7
      %s280 = scalar_select %p279, %s276, 7
      %s281 = smul.addr %s278, 8
      %s282 = sadd.s32 %s280, %s281
      %s283 = smul.addr %s282, 8
      %s284 = scalar_lea.vmem %s0, %s283
      %p285 = pneg %p52
      %p286 = pneg %p49
      %p287 = scmp.lt.s32.totalorder %s21, 1
      %s288 = scalar_select %p287, %s21, 1
      %s289 = smul.addr %s288, 8
      %s290 = smul.addr %s289, 8
      %s291 = scalar_lea.vmem %s1, %s290
      %p292 = pneg %p78
      %p293 = pneg %p75
      %p294 = scmp.lt.s32.totalorder %s21, 1
      %s295 = scalar_select %p294, %s21, 1
      %s296 = smul.addr %s295, 8
      %s297 = smul.addr %s296, 8
      %s298 = scalar_lea.vmem %s2, %s297
      %p299 = pneg %p104
      %p300 = pneg %p101
      %s301 = smul.u32 8, %s22
      %p302 = scmp.lt.s32.totalorder %s21, 1
      %s303 = scalar_select %p302, %s21, 1
      %p304 = scmp.lt.s32.totalorder %s301, 7
      %s305 = scalar_select %p304, %s301, 7
      %s306 = smul.addr %s303, 8
      %s307 = sadd.s32 %s305, %s306
      %s308 = smul.addr %s307, 8
      %s309 = scalar_lea.vmem %s3, %s308
      %p310 = pneg %p132
      %p311 = pneg %p129
      %p312 = pneg %p153
      %p313 = pneg %p150
      %p314 = pneg %p174
      %p315 = pneg %p171
      %p316 = pneg %p202
      %p317 = pneg %p199
      %s318 = smul.u32 8, %s22
      %p319 = scmp.lt.s32.totalorder %s21, 1
      %s320 = scalar_select %p319, %s21, 1
      %p321 = scmp.lt.s32.totalorder %s318, 7
      %s322 = scalar_select %p321, %s318, 7
      %s323 = smul.addr %s320, 8
      %s324 = sadd.s32 %s322, %s323
      %s325 = smul.addr %s324, 8
      %s326 = scalar_lea.vmem %s6, %s325
      %s327 = smul.u32 8, %s22
      %p328 = scmp.lt.s32.totalorder %s21, 1
      %s329 = scalar_select %p328, %s21, 1
      %p330 = scmp.lt.s32.totalorder %s327, 7
      %s331 = scalar_select %p330, %s327, 7
      %s332 = smul.addr %s329, 8
      %s333 = sadd.s32 %s331, %s332
      %s334 = smul.addr %s333, 8
      %s335 = scalar_lea.vmem %s0, %s334
      %s336 = smul.u32 8, %s22
      %p337 = scmp.lt.s32.totalorder %s21, 1
      %s338 = scalar_select %p337, %s21, 1
      %s339 = smul.addr %s338, 8
      %s340 = smul.addr %s339, 8
      %s341 = scalar_lea.vmem %s1, %s340
      %p342 = scmp.lt.s32.totalorder %s21, 1
      %s343 = scalar_select %p342, %s21, 1
      %s344 = smul.addr %s343, 8
      %s345 = smul.addr %s344, 8
      %s346 = scalar_lea.vmem %s2, %s345
      %s347 = smul.u32 8, %s22
      %p348 = scmp.lt.s32.totalorder %s21, 1
      %s349 = scalar_select %p348, %s21, 1
      %p350 = scmp.lt.s32.totalorder %s347, 7
      %s351 = scalar_select %p350, %s347, 7
      %s352 = smul.addr %s349, 8
      %s353 = sadd.s32 %s351, %s352
      %s354 = smul.addr %s353, 8
      %s355 = scalar_lea.vmem %s3, %s354
      %s356 = smul.u32 8, %s22
      %s357 = smul.u32 8, %s22
      %p358 = scmp.lt.s32.totalorder %s21, 1
      %s359 = scalar_select %p358, %s21, 1
      %p360 = scmp.lt.s32.totalorder %s357, 7
      %s361 = scalar_select %p360, %s357, 7
      %s362 = smul.addr %s359, 8
      %s363 = sadd.s32 %s361, %s362
      %s364 = smul.addr %s363, 8
      %s365 = scalar_lea.vmem %s6, %s364
      %s366 = smul.u32 8, %s22
      %vm367 = vcmask 7168
      %368 = vst.msk [vmem:[#allocation2] sm:$0xff] %vm367, -inf
      %369 = vst.msk [vmem:[#allocation2 + $0x8] sm:$0xff] %vm367, -inf
      %370 = vst.msk [vmem:[#allocation2 + $0x10] sm:$0xff] %vm367, -inf
      %371 = vst.msk [vmem:[#allocation2 + $0x18] sm:$0xff] %vm367, -inf
      %372 = vst.msk [vmem:[#allocation2 + $0x20] sm:$0xff] %vm367, -inf
      %373 = vst.msk [vmem:[#allocation2 + $0x28] sm:$0xff] %vm367, -inf
      %374 = vst.msk [vmem:[#allocation2 + $0x30] sm:$0xff] %vm367, -inf
      %375 = vst.msk [vmem:[#allocation2 + $0x38] sm:$0xff] %vm367, -inf
      %376 = vst.msk [vmem:[#allocation3] sm:$0xff] %vm367, 0.0
      %377 = vst.msk [vmem:[#allocation3 + $0x8] sm:$0xff] %vm367, 0.0
      %378 = vst.msk [vmem:[#allocation3 + $0x10] sm:$0xff] %vm367, 0.0
      %379 = vst.msk [vmem:[#allocation3 + $0x18] sm:$0xff] %vm367, 0.0
      %380 = vst.msk [vmem:[#allocation3 + $0x20] sm:$0xff] %vm367, 0.0
      %381 = vst.msk [vmem:[#allocation3 + $0x28] sm:$0xff] %vm367, 0.0
      %382 = vst.msk [vmem:[#allocation3 + $0x30] sm:$0xff] %vm367, 0.0
      %383 = vst.msk [vmem:[#allocation3 + $0x38] sm:$0xff] %vm367, 0.0
      %vm384 = vcmask 261120
      %385 = vst.msk [vmem:[#allocation4] sm:$0xff] %vm384, 0.0
      %386 = vst.msk [vmem:[#allocation4 + $0x8] sm:$0xff] %vm384, 0.0
      %387 = vst.msk [vmem:[#allocation4 + $0x10] sm:$0xff] %vm384, 0.0
      %388 = vst.msk [vmem:[#allocation4 + $0x18] sm:$0xff] %vm384, 0.0
      %389 = vst.msk [vmem:[#allocation4 + $0x20] sm:$0xff] %vm384, 0.0
      %390 = vst.msk [vmem:[#allocation4 + $0x28] sm:$0xff] %vm384, 0.0
      %391 = vst.msk [vmem:[#allocation4 + $0x30] sm:$0xff] %vm384, 0.0
      %392 = vst.msk [vmem:[#allocation4 + $0x38] sm:$0xff] %vm384, 0.0
      %v393 = vld [vmem:[%s335] sm:$0xff]
      %v394 = vld [vmem:[%s335 + $0x8] sm:$0xff]
      %v395 = vld [vmem:[%s335 + $0x10] sm:$0xff]
      %v396 = vld [vmem:[%s335 + $0x18] sm:$0xff]
      %v397 = vld [vmem:[%s335 + $0x20] sm:$0xff]
      %v398 = vld [vmem:[%s335 + $0x28] sm:$0xff]
      %v399 = vld [vmem:[%s335 + $0x30] sm:$0xff]
      %v400 = vld [vmem:[%s335 + $0x38] sm:$0xff]
      %v401 = vld [vmem:[%s341] sm:$0xff]
      %v402 = vld [vmem:[%s341 + $0x8] sm:$0xff]
      %v403 = vld [vmem:[%s341 + $0x10] sm:$0xff]
      %v404 = vld [vmem:[%s341 + $0x18] sm:$0xff]
      %v405 = vld [vmem:[%s341 + $0x20] sm:$0xff]
      %v406 = vld [vmem:[%s341 + $0x28] sm:$0xff]
      %v407 = vld [vmem:[%s341 + $0x30] sm:$0xff]
      %v408 = vld [vmem:[%s341 + $0x38] sm:$0xff]
      %v409 = vld [vmem:[%s346] sm:$0xff]
      %v410 = vld [vmem:[%s346 + $0x8] sm:$0xff]
      %v411 = vld [vmem:[%s346 + $0x10] sm:$0xff]
      %v412 = vld [vmem:[%s346 + $0x18] sm:$0xff]
      %v413 = vld [vmem:[%s346 + $0x20] sm:$0xff]
      %v414 = vld [vmem:[%s346 + $0x28] sm:$0xff]
      %v415 = vld [vmem:[%s346 + $0x30] sm:$0xff]
      %v416 = vld [vmem:[%s346 + $0x38] sm:$0xff]
      %v418 = vsel %vm384, %v393, 0
      %v421 = vsel %vm384, %v394, 0
      %v424 = vsel %vm384, %v395, 0
      %v427 = vsel %vm384, %v396, 0
      %v430 = vsel %vm384, %v397, 0
      %v433 = vsel %vm384, %v398, 0
      %v436 = vsel %vm384, %v399, 0
      %v439 = vsel %vm384, %v400, 0
      %v442 = vsel %vm384, %v401, 0
      %v445 = vsel %vm384, %v402, 0
      %v448 = vsel %vm384, %v403, 0
      %v451 = vsel %vm384, %v404, 0
      %v454 = vsel %vm384, %v405, 0
      %v457 = vsel %vm384, %v406, 0
      %v460 = vsel %vm384, %v407, 0
      %v463 = vsel %vm384, %v408, 0
      %465 = vmatpush.xpose.msra.mxu0 0.0
      %466 = vmatpush.xpose.msra.mxu0 0.0
      %467 = vmatpush.xpose.msra.mxu0 0.0
      %468 = vmatpush.xpose.msra.mxu0 0.0
      %469 = vmatpush.xpose.msra.mxu0 0.0
      %470 = vmatpush.xpose.msra.mxu0 0.0
      %471 = vmatpush.xpose.msra.mxu0 0.0
      %472 = vmatpush.xpose.msra.mxu0 0.0
      %473 = vmatpush.xpose.msra.mxu0 %v463
      %474 = vmatpush.xpose.msra.mxu0 %v460
      %475 = vmatpush.xpose.msra.mxu0 %v457
      %476 = vmatpush.xpose.msra.mxu0 %v454
      %477 = vmatpush.xpose.msra.mxu0 %v451
      %478 = vmatpush.xpose.msra.mxu0 %v448
      %479 = vmatpush.xpose.msra.mxu0 %v445
      %480 = vmatpush.xpose.msra.mxu0 %v442
      %481 = vmatmul.f32.gmra.mxu0 %v418
      %v482 = vpop.f32.mrf.mxu0
      %v483 = vadd.f32 0.0, %v482
      %484 = vmatmul.f32.gmra.mxu0 %v421
      %v485 = vpop.f32.mrf.mxu0
      %v486 = vadd.f32 0.0, %v485
      %487 = vmatmul.f32.gmra.mxu0 %v424
      %v488 = vpop.f32.mrf.mxu0
      %v489 = vadd.f32 0.0, %v488
      %490 = vmatmul.f32.gmra.mxu0 %v427
      %v491 = vpop.f32.mrf.mxu0
      %v492 = vadd.f32 0.0, %v491
      %493 = vmatmul.f32.gmra.mxu0 %v430
      %v494 = vpop.f32.mrf.mxu0
      %v495 = vadd.f32 0.0, %v494
      %496 = vmatmul.f32.gmra.mxu0 %v433
      %v497 = vpop.f32.mrf.mxu0
      %v498 = vadd.f32 0.0, %v497
      %499 = vmatmul.f32.gmra.mxu0 %v436
      %v500 = vpop.f32.mrf.mxu0
      %v501 = vadd.f32 0.0, %v500
      %502 = vmatmul.f32.gmra.mxu0 %v439
      %v503 = vpop.f32.mrf.mxu0
      %v504 = vadd.f32 0.0, %v503
      %505 = vdwg.mxu0
      %v506 = vld [vmem:[#allocation2] sm:$0xff]
      %v507 = vld [vmem:[#allocation2 + $0x8] sm:$0xff]
      %v508 = vld [vmem:[#allocation2 + $0x10] sm:$0xff]
      %v509 = vld [vmem:[#allocation2 + $0x18] sm:$0xff]
      %v510 = vld [vmem:[#allocation2 + $0x20] sm:$0xff]
      %v511 = vld [vmem:[#allocation2 + $0x28] sm:$0xff]
      %v512 = vld [vmem:[#allocation2 + $0x30] sm:$0xff]
      %v513 = vld [vmem:[#allocation2 + $0x38] sm:$0xff]
      %vm514 = vcmask 523264
      %v515 = vsel %vm514, %v483, -inf
      %516 = vmax.xlane.f32.xlu0 %v515
      %v517 = vpop.xlane.xlu0 %516
      %v518 = vsel %vm514, %v486, -inf
      %519 = vmax.xlane.f32.xlu0 %v518
      %v520 = vpop.xlane.xlu0 %519
      %v521 = vsel %vm514, %v489, -inf
      %522 = vmax.xlane.f32.xlu0 %v521
      %v523 = vpop.xlane.xlu0 %522
      %v524 = vsel %vm514, %v492, -inf
      %525 = vmax.xlane.f32.xlu0 %v524
      %v526 = vpop.xlane.xlu0 %525
      %v527 = vsel %vm514, %v495, -inf
      %528 = vmax.xlane.f32.xlu0 %v527
      %v529 = vpop.xlane.xlu0 %528
      %v530 = vsel %vm514, %v498, -inf
      %531 = vmax.xlane.f32.xlu0 %v530
      %v532 = vpop.xlane.xlu0 %531
      %v533 = vsel %vm514, %v501, -inf
      %534 = vmax.xlane.f32.xlu0 %v533
      %v535 = vpop.xlane.xlu0 %534
      %v536 = vsel %vm514, %v504, -inf
      %537 = vmax.xlane.f32.xlu0 %v536
      %v538 = vpop.xlane.xlu0 %537
      %v539 = vmax.f32 %v506, %v517
      %v540 = vmax.f32 %v507, %v520
      %v541 = vmax.f32 %v508, %v523
      %v542 = vmax.f32 %v509, %v526
      %v543 = vmax.f32 %v510, %v529
      %v544 = vmax.f32 %v511, %v532
      %v545 = vmax.f32 %v512, %v535
      %v546 = vmax.f32 %v513, %v538
      %v547 = vsub.f32 %v506, %v539
      %v548 = vsub.f32 %v507, %v540
      %v549 = vsub.f32 %v508, %v541
      %v550 = vsub.f32 %v509, %v542
      %v551 = vsub.f32 %v510, %v543
      %v552 = vsub.f32 %v511, %v544
      %v553 = vsub.f32 %v512, %v545
      %v554 = vsub.f32 %v513, %v546
      %v555 = vmul.f32 %v547, 1.442695
      %v556 = vpow.pop %v555
      %v557 = vmul.f32 %v548, 1.442695
      %v558 = vpow.pop %v557
      %v559 = vmul.f32 %v549, 1.442695
      %v560 = vpow.pop %v559
      %v561 = vmul.f32 %v550, 1.442695
      %v562 = vpow.pop %v561
      %v563 = vmul.f32 %v551, 1.442695
      %v564 = vpow.pop %v563
      %v565 = vmul.f32 %v552, 1.442695
      %v566 = vpow.pop %v565
      %v567 = vmul.f32 %v553, 1.442695
      %v568 = vpow.pop %v567
      %v569 = vmul.f32 %v554, 1.442695
      %v570 = vpow.pop %v569
      %572 = vset.pattern.permute.xlu0 0
      %573 = vperm.xlu0 %572, %v539
      %v574 = vpop.permute.xlu0 %573
      %577 = vset.pattern.permute.xlu0 0
      %578 = vperm.xlu0 %577, %v540
      %v579 = vpop.permute.xlu0 %578
      %582 = vset.pattern.permute.xlu0 0
      %583 = vperm.xlu0 %582, %v541
      %v584 = vpop.permute.xlu0 %583
      %587 = vset.pattern.permute.xlu0 0
      %588 = vperm.xlu0 %587, %v542
      %v589 = vpop.permute.xlu0 %588
      %592 = vset.pattern.permute.xlu0 0
      %593 = vperm.xlu0 %592, %v543
      %v594 = vpop.permute.xlu0 %593
      %597 = vset.pattern.permute.xlu0 0
      %598 = vperm.xlu0 %597, %v544
      %v599 = vpop.permute.xlu0 %598
      %602 = vset.pattern.permute.xlu0 0
      %603 = vperm.xlu0 %602, %v545
      %v604 = vpop.permute.xlu0 %603
      %607 = vset.pattern.permute.xlu0 0
      %608 = vperm.xlu0 %607, %v546
      %v609 = vpop.permute.xlu0 %608
      %v611 = vsub.f32 %v483, %v574
      %v612 = vsub.f32 %v486, %v579
      %v613 = vsub.f32 %v489, %v584
      %v614 = vsub.f32 %v492, %v589
      %v615 = vsub.f32 %v495, %v594
      %v616 = vsub.f32 %v498, %v599
      %v617 = vsub.f32 %v501, %v604
      %v618 = vsub.f32 %v504, %v609
      %v619 = vmul.f32 %v611, 1.442695
      %v620 = vpow.pop %v619
      %v621 = vmul.f32 %v612, 1.442695
      %v622 = vpow.pop %v621
      %v623 = vmul.f32 %v613, 1.442695
      %v624 = vpow.pop %v623
      %v625 = vmul.f32 %v614, 1.442695
      %v626 = vpow.pop %v625
      %v627 = vmul.f32 %v615, 1.442695
      %v628 = vpow.pop %v627
      %v629 = vmul.f32 %v616, 1.442695
      %v630 = vpow.pop %v629
      %v631 = vmul.f32 %v617, 1.442695
      %v632 = vpow.pop %v631
      %v633 = vmul.f32 %v618, 1.442695
      %v634 = vpow.pop %v633
      %v635 = vld [vmem:[#allocation3] sm:$0xff]
      %v636 = vld [vmem:[#allocation3 + $0x8] sm:$0xff]
      %v637 = vld [vmem:[#allocation3 + $0x10] sm:$0xff]
      %v638 = vld [vmem:[#allocation3 + $0x18] sm:$0xff]
      %v639 = vld [vmem:[#allocation3 + $0x20] sm:$0xff]
      %v640 = vld [vmem:[#allocation3 + $0x28] sm:$0xff]
      %v641 = vld [vmem:[#allocation3 + $0x30] sm:$0xff]
      %v642 = vld [vmem:[#allocation3 + $0x38] sm:$0xff]
      %v643 = vmul.f32 %v556, %v635
      %v644 = vmul.f32 %v558, %v636
      %v645 = vmul.f32 %v560, %v637
      %v646 = vmul.f32 %v562, %v638
      %v647 = vmul.f32 %v564, %v639
      %v648 = vmul.f32 %v566, %v640
      %v649 = vmul.f32 %v568, %v641
      %v650 = vmul.f32 %v570, %v642
      %v651 = vsel %vm514, %v620, 0.0
      %652 = vadd.xlane.f32.xlu0 %v651
      %v653 = vpop.xlane.xlu0 %652
      %v654 = vsel %vm514, %v622, 0.0
      %655 = vadd.xlane.f32.xlu0 %v654
      %v656 = vpop.xlane.xlu0 %655
      %v657 = vsel %vm514, %v624, 0.0
      %658 = vadd.xlane.f32.xlu0 %v657
      %v659 = vpop.xlane.xlu0 %658
      %v660 = vsel %vm514, %v626, 0.0
      %661 = vadd.xlane.f32.xlu0 %v660
      %v662 = vpop.xlane.xlu0 %661
      %v663 = vsel %vm514, %v628, 0.0
      %664 = vadd.xlane.f32.xlu0 %v663
      %v665 = vpop.xlane.xlu0 %664
      %v666 = vsel %vm514, %v630, 0.0
      %667 = vadd.xlane.f32.xlu0 %v666
      %v668 = vpop.xlane.xlu0 %667
      %v669 = vsel %vm514, %v632, 0.0
      %670 = vadd.xlane.f32.xlu0 %v669
      %v671 = vpop.xlane.xlu0 %670
      %v672 = vsel %vm514, %v634, 0.0
      %673 = vadd.xlane.f32.xlu0 %v672
      %v674 = vpop.xlane.xlu0 %673
      %v675 = vadd.f32 %v643, %v653
      %v676 = vadd.f32 %v644, %v656
      %v677 = vadd.f32 %v645, %v659
      %v678 = vadd.f32 %v646, %v662
      %v679 = vadd.f32 %v647, %v665
      %v680 = vadd.f32 %v648, %v668
      %v681 = vadd.f32 %v649, %v671
      %v682 = vadd.f32 %v650, %v674
      %683 = vst.msk [vmem:[#allocation3] sm:$0xff] %vm367, %v675
      %684 = vst.msk [vmem:[#allocation3 + $0x8] sm:$0xff] %vm367, %v676
      %685 = vst.msk [vmem:[#allocation3 + $0x10] sm:$0xff] %vm367, %v677
      %686 = vst.msk [vmem:[#allocation3 + $0x18] sm:$0xff] %vm367, %v678
      %687 = vst.msk [vmem:[#allocation3 + $0x20] sm:$0xff] %vm367, %v679
      %688 = vst.msk [vmem:[#allocation3 + $0x28] sm:$0xff] %vm367, %v680
      %689 = vst.msk [vmem:[#allocation3 + $0x30] sm:$0xff] %vm367, %v681
      %690 = vst.msk [vmem:[#allocation3 + $0x38] sm:$0xff] %vm367, %v682
      %v691 = vld [vmem:[#allocation4] sm:$0xff]
      %v692 = vld [vmem:[#allocation4 + $0x8] sm:$0xff]
      %v693 = vld [vmem:[#allocation4 + $0x10] sm:$0xff]
      %v694 = vld [vmem:[#allocation4 + $0x18] sm:$0xff]
      %v695 = vld [vmem:[#allocation4 + $0x20] sm:$0xff]
      %v696 = vld [vmem:[#allocation4 + $0x28] sm:$0xff]
      %v697 = vld [vmem:[#allocation4 + $0x30] sm:$0xff]
      %v698 = vld [vmem:[#allocation4 + $0x38] sm:$0xff]
      %700 = vset.pattern.permute.xlu0 0
      %701 = vperm.xlu0 %700, %v556
      %v702 = vpop.permute.xlu0 %701
      %705 = vset.pattern.permute.xlu0 0
      %706 = vperm.xlu0 %705, %v558
      %v707 = vpop.permute.xlu0 %706
      %710 = vset.pattern.permute.xlu0 0
      %711 = vperm.xlu0 %710, %v560
      %v712 = vpop.permute.xlu0 %711
      %715 = vset.pattern.permute.xlu0 0
      %716 = vperm.xlu0 %715, %v562
      %v717 = vpop.permute.xlu0 %716
      %720 = vset.pattern.permute.xlu0 0
      %721 = vperm.xlu0 %720, %v564
      %v722 = vpop.permute.xlu0 %721
      %725 = vset.pattern.permute.xlu0 0
      %726 = vperm.xlu0 %725, %v566
      %v727 = vpop.permute.xlu0 %726
      %730 = vset.pattern.permute.xlu0 0
      %731 = vperm.xlu0 %730, %v568
      %v732 = vpop.permute.xlu0 %731
      %735 = vset.pattern.permute.xlu0 0
      %736 = vperm.xlu0 %735, %v570
      %v737 = vpop.permute.xlu0 %736
      %v739 = vmul.f32 %v702, %v691
      %v740 = vmul.f32 %v707, %v692
      %v741 = vmul.f32 %v712, %v693
      %v742 = vmul.f32 %v717, %v694
      %v743 = vmul.f32 %v722, %v695
      %v744 = vmul.f32 %v727, %v696
      %v745 = vmul.f32 %v732, %v697
      %v746 = vmul.f32 %v737, %v698
      %v748 = vsel %vm514, %v620, 0
      %v751 = vsel %vm514, %v622, 0
      %v754 = vsel %vm514, %v624, 0
      %v757 = vsel %vm514, %v626, 0
      %v760 = vsel %vm514, %v628, 0
      %v763 = vsel %vm514, %v630, 0
      %v766 = vsel %vm514, %v632, 0
      %v769 = vsel %vm514, %v634, 0
      %771 = vmatpush.msra.mxu0 0.0
      %772 = vmatpush.msra.mxu0 0.0
      %773 = vmatpush.msra.mxu0 0.0
      %774 = vmatpush.msra.mxu0 0.0
      %775 = vmatpush.msra.mxu0 0.0
      %776 = vmatpush.msra.mxu0 0.0
      %777 = vmatpush.msra.mxu0 0.0
      %778 = vmatpush.msra.mxu0 0.0
      %779 = vmatpush.msra.mxu0 %v416
      %780 = vmatpush.msra.mxu0 %v415
      %781 = vmatpush.msra.mxu0 %v414
      %782 = vmatpush.msra.mxu0 %v413
      %783 = vmatpush.msra.mxu0 %v412
      %784 = vmatpush.msra.mxu0 %v411
      %785 = vmatpush.msra.mxu0 %v410
      %786 = vmatpush.msra.mxu0 %v409
      %787 = vmatmul.f32.gmra.mxu0 %v748
      %v788 = vpop.f32.mrf.mxu0
      %v789 = vadd.f32 0.0, %v788
      %790 = vmatmul.f32.gmra.mxu0 %v751
      %v791 = vpop.f32.mrf.mxu0
      %v792 = vadd.f32 0.0, %v791
      %793 = vmatmul.f32.gmra.mxu0 %v754
      %v794 = vpop.f32.mrf.mxu0
      %v795 = vadd.f32 0.0, %v794
      %796 = vmatmul.f32.gmra.mxu0 %v757
      %v797 = vpop.f32.mrf.mxu0
      %v798 = vadd.f32 0.0, %v797
      %799 = vmatmul.f32.gmra.mxu0 %v760
      %v800 = vpop.f32.mrf.mxu0
      %v801 = vadd.f32 0.0, %v800
      %802 = vmatmul.f32.gmra.mxu0 %v763
      %v803 = vpop.f32.mrf.mxu0
      %v804 = vadd.f32 0.0, %v803
      %805 = vmatmul.f32.gmra.mxu0 %v766
      %v806 = vpop.f32.mrf.mxu0
      %v807 = vadd.f32 0.0, %v806
      %808 = vmatmul.f32.gmra.mxu0 %v769
      %v809 = vpop.f32.mrf.mxu0
      %v810 = vadd.f32 0.0, %v809
      %811 = vdwg.mxu0
      %v812 = vadd.f32 %v739, %v789
      %v813 = vadd.f32 %v740, %v792
      %v814 = vadd.f32 %v741, %v795
      %v815 = vadd.f32 %v742, %v798
      %v816 = vadd.f32 %v743, %v801
      %v817 = vadd.f32 %v744, %v804
      %v818 = vadd.f32 %v745, %v807
      %v819 = vadd.f32 %v746, %v810
      %820 = vst.msk [vmem:[#allocation4] sm:$0xff] %vm384, %v812
      %821 = vst.msk [vmem:[#allocation4 + $0x8] sm:$0xff] %vm384, %v813
      %822 = vst.msk [vmem:[#allocation4 + $0x10] sm:$0xff] %vm384, %v814
      %823 = vst.msk [vmem:[#allocation4 + $0x18] sm:$0xff] %vm384, %v815
      %824 = vst.msk [vmem:[#allocation4 + $0x20] sm:$0xff] %vm384, %v816
      %825 = vst.msk [vmem:[#allocation4 + $0x28] sm:$0xff] %vm384, %v817
      %826 = vst.msk [vmem:[#allocation4 + $0x30] sm:$0xff] %vm384, %v818
      %827 = vst.msk [vmem:[#allocation4 + $0x38] sm:$0xff] %vm384, %v819
      %828 = vst.msk [vmem:[#allocation2] sm:$0xff] %vm367, %v539
      %829 = vst.msk [vmem:[#allocation2 + $0x8] sm:$0xff] %vm367, %v540
      %830 = vst.msk [vmem:[#allocation2 + $0x10] sm:$0xff] %vm367, %v541
      %831 = vst.msk [vmem:[#allocation2 + $0x18] sm:$0xff] %vm367, %v542
      %832 = vst.msk [vmem:[#allocation2 + $0x20] sm:$0xff] %vm367, %v543
      %833 = vst.msk [vmem:[#allocation2 + $0x28] sm:$0xff] %vm367, %v544
      %834 = vst.msk [vmem:[#allocation2 + $0x30] sm:$0xff] %vm367, %v545
      %835 = vst.msk [vmem:[#allocation2 + $0x38] sm:$0xff] %vm367, %v546
      %v836 = vld [vmem:[#allocation3] sm:$0xff]
      %v837 = vld [vmem:[#allocation3 + $0x8] sm:$0xff]
      %v838 = vld [vmem:[#allocation3 + $0x10] sm:$0xff]
      %v839 = vld [vmem:[#allocation3 + $0x18] sm:$0xff]
      %v840 = vld [vmem:[#allocation3 + $0x20] sm:$0xff]
      %v841 = vld [vmem:[#allocation3 + $0x28] sm:$0xff]
      %v842 = vld [vmem:[#allocation3 + $0x30] sm:$0xff]
      %v843 = vld [vmem:[#allocation3 + $0x38] sm:$0xff]
      %v844 = vrcp.pop %v836
      %v845 = vmul.f32 %v836, %v844
      %v846 = vsub.f32 1.0, %v845
      %v847 = vmul.f32 %v844, %v846
      %v848 = vadd.f32 %v844, %v847
      %vm849 = vweird.f32 %v836
      %vm850 = vweird.f32 %v844
      %vm851 = vmor %vm849, %vm850
      %v852 = vsel %vm851, %v844, %v848
      %v853 = vand.u32 2147483647, %v836
      %vm854 = vcmp.eq.f32.partialorder %v853, 8.507059e+37
      %v855 = vand.u32 %v836, 2147483648
      %v856 = vor.u32 1.1754944e-38, %v855
      %v857 = vsel %vm854, %v856, %v852
      %v858 = vrcp.pop %v837
      %v859 = vmul.f32 %v837, %v858
      %v860 = vsub.f32 1.0, %v859
      %v861 = vmul.f32 %v858, %v860
      %v862 = vadd.f32 %v858, %v861
      %vm863 = vweird.f32 %v837
      %vm864 = vweird.f32 %v858
      %vm865 = vmor %vm863, %vm864
      %v866 = vsel %vm865, %v858, %v862
      %v867 = vand.u32 2147483647, %v837
      %vm868 = vcmp.eq.f32.partialorder %v867, 8.507059e+37
      %v869 = vand.u32 %v837, 2147483648
      %v870 = vor.u32 1.1754944e-38, %v869
      %v871 = vsel %vm868, %v870, %v866
      %v872 = vrcp.pop %v838
      %v873 = vmul.f32 %v838, %v872
      %v874 = vsub.f32 1.0, %v873
      %v875 = vmul.f32 %v872, %v874
      %v876 = vadd.f32 %v872, %v875
      %vm877 = vweird.f32 %v838
      %vm878 = vweird.f32 %v872
      %vm879 = vmor %vm877, %vm878
      %v880 = vsel %vm879, %v872, %v876
      %v881 = vand.u32 2147483647, %v838
      %vm882 = vcmp.eq.f32.partialorder %v881, 8.507059e+37
      %v883 = vand.u32 %v838, 2147483648
      %v884 = vor.u32 1.1754944e-38, %v883
      %v885 = vsel %vm882, %v884, %v880
      %v886 = vrcp.pop %v839
      %v887 = vmul.f32 %v839, %v886
      %v888 = vsub.f32 1.0, %v887
      %v889 = vmul.f32 %v886, %v888
      %v890 = vadd.f32 %v886, %v889
      %vm891 = vweird.f32 %v839
      %vm892 = vweird.f32 %v886
      %vm893 = vmor %vm891, %vm892
      %v894 = vsel %vm893, %v886, %v890
      %v895 = vand.u32 2147483647, %v839
      %vm896 = vcmp.eq.f32.partialorder %v895, 8.507059e+37
      %v897 = vand.u32 %v839, 2147483648
      %v898 = vor.u32 1.1754944e-38, %v897
      %v899 = vsel %vm896, %v898, %v894
      %v900 = vrcp.pop %v840
      %v901 = vmul.f32 %v840, %v900
      %v902 = vsub.f32 1.0, %v901
      %v903 = vmul.f32 %v900, %v902
      %v904 = vadd.f32 %v900, %v903
      %vm905 = vweird.f32 %v840
      %vm906 = vweird.f32 %v900
      %vm907 = vmor %vm905, %vm906
      %v908 = vsel %vm907, %v900, %v904
      %v909 = vand.u32 2147483647, %v840
      %vm910 = vcmp.eq.f32.partialorder %v909, 8.507059e+37
      %v911 = vand.u32 %v840, 2147483648
      %v912 = vor.u32 1.1754944e-38, %v911
      %v913 = vsel %vm910, %v912, %v908
      %v914 = vrcp.pop %v841
      %v915 = vmul.f32 %v841, %v914
      %v916 = vsub.f32 1.0, %v915
      %v917 = vmul.f32 %v914, %v916
      %v918 = vadd.f32 %v914, %v917
      %vm919 = vweird.f32 %v841
      %vm920 = vweird.f32 %v914
      %vm921 = vmor %vm919, %vm920
      %v922 = vsel %vm921, %v914, %v918
      %v923 = vand.u32 2147483647, %v841
      %vm924 = vcmp.eq.f32.partialorder %v923, 8.507059e+37
      %v925 = vand.u32 %v841, 2147483648
      %v926 = vor.u32 1.1754944e-38, %v925
      %v927 = vsel %vm924, %v926, %v922
      %v928 = vrcp.pop %v842
      %v929 = vmul.f32 %v842, %v928
      %v930 = vsub.f32 1.0, %v929
      %v931 = vmul.f32 %v928, %v930
      %v932 = vadd.f32 %v928, %v931
      %vm933 = vweird.f32 %v842
      %vm934 = vweird.f32 %v928
      %vm935 = vmor %vm933, %vm934
      %v936 = vsel %vm935, %v928, %v932
      %v937 = vand.u32 2147483647, %v842
      %vm938 = vcmp.eq.f32.partialorder %v937, 8.507059e+37
      %v939 = vand.u32 %v842, 2147483648
      %v940 = vor.u32 1.1754944e-38, %v939
      %v941 = vsel %vm938, %v940, %v936
      %v942 = vrcp.pop %v843
      %v943 = vmul.f32 %v843, %v942
      %v944 = vsub.f32 1.0, %v943
      %v945 = vmul.f32 %v942, %v944
      %v946 = vadd.f32 %v942, %v945
      %vm947 = vweird.f32 %v843
      %vm948 = vweird.f32 %v942
      %vm949 = vmor %vm947, %vm948
      %v950 = vsel %vm949, %v942, %v946
      %v951 = vand.u32 2147483647, %v843
      %vm952 = vcmp.eq.f32.partialorder %v951, 8.507059e+37
      %v953 = vand.u32 %v843, 2147483648
      %v954 = vor.u32 1.1754944e-38, %v953
      %v955 = vsel %vm952, %v954, %v950
      %v956 = vld [vmem:[#allocation4] sm:$0xff]
      %v957 = vld [vmem:[#allocation4 + $0x8] sm:$0xff]
      %v958 = vld [vmem:[#allocation4 + $0x10] sm:$0xff]
      %v959 = vld [vmem:[#allocation4 + $0x18] sm:$0xff]
      %v960 = vld [vmem:[#allocation4 + $0x20] sm:$0xff]
      %v961 = vld [vmem:[#allocation4 + $0x28] sm:$0xff]
      %v962 = vld [vmem:[#allocation4 + $0x30] sm:$0xff]
      %v963 = vld [vmem:[#allocation4 + $0x38] sm:$0xff]
      %965 = vset.pattern.permute.xlu0 0
      %966 = vperm.xlu0 %965, %v857
      %v967 = vpop.permute.xlu0 %966
      %970 = vset.pattern.permute.xlu0 0
      %971 = vperm.xlu0 %970, %v871
      %v972 = vpop.permute.xlu0 %971
      %975 = vset.pattern.permute.xlu0 0
      %976 = vperm.xlu0 %975, %v885
      %v977 = vpop.permute.xlu0 %976
      %980 = vset.pattern.permute.xlu0 0
      %981 = vperm.xlu0 %980, %v899
      %v982 = vpop.permute.xlu0 %981
      %985 = vset.pattern.permute.xlu0 0
      %986 = vperm.xlu0 %985, %v913
      %v987 = vpop.permute.xlu0 %986
      %990 = vset.pattern.permute.xlu0 0
      %991 = vperm.xlu0 %990, %v927
      %v992 = vpop.permute.xlu0 %991
      %995 = vset.pattern.permute.xlu0 0
      %996 = vperm.xlu0 %995, %v941
      %v997 = vpop.permute.xlu0 %996
      %1000 = vset.pattern.permute.xlu0 0
      %1001 = vperm.xlu0 %1000, %v955
      %v1002 = vpop.permute.xlu0 %1001
      %v1004 = vmul.f32 %v956, %v967
      %v1005 = vmul.f32 %v957, %v972
      %v1006 = vmul.f32 %v958, %v977
      %v1007 = vmul.f32 %v959, %v982
      %v1008 = vmul.f32 %v960, %v987
      %v1009 = vmul.f32 %v961, %v992
      %v1010 = vmul.f32 %v962, %v997
      %v1011 = vmul.f32 %v963, %v1002
      %v1012 = vld [vmem:[%s4] sm:$0xff]
      %v1013 = vld [vmem:[%s4 + $0x8] sm:$0xff]
      %v1014 = vld [vmem:[%s4 + $0x10] sm:$0xff]
      %v1015 = vld [vmem:[%s4 + $0x18] sm:$0xff]
      %v1016 = vld [vmem:[%s5] sm:$0x1]
      %v1018 = vperm.slane %v1016, 0
      %v1021 = vsel %vm384, %v1004, 0
      %v1024 = vsel %vm384, %v1005, 0
      %v1027 = vsel %vm384, %v1006, 0
      %v1030 = vsel %vm384, %v1007, 0
      %v1033 = vsel %vm384, %v1008, 0
      %v1036 = vsel %vm384, %v1009, 0
      %v1039 = vsel %vm384, %v1010, 0
      %v1042 = vsel %vm384, %v1011, 0
      %1044 = vmatpush.msra.mxu0 0.0
      %1045 = vmatpush.msra.mxu0 0.0
      %1046 = vmatpush.msra.mxu0 0.0
      %1047 = vmatpush.msra.mxu0 0.0
      %1048 = vmatpush.msra.mxu0 0.0
      %1049 = vmatpush.msra.mxu0 0.0
      %1050 = vmatpush.msra.mxu0 0.0
      %1051 = vmatpush.msra.mxu0 0.0
      %1052 = vmatpush.msra.mxu0 0.0
      %1053 = vmatpush.msra.mxu0 0.0
      %1054 = vmatpush.msra.mxu0 0.0
      %1055 = vmatpush.msra.mxu0 0.0
      %1056 = vmatpush.msra.mxu0 %v1015
      %1057 = vmatpush.msra.mxu0 %v1014
      %1058 = vmatpush.msra.mxu0 %v1013
      %1059 = vmatpush.msra.mxu0 %v1012
      %1060 = vmatmul.f32.gmra.mxu0 %v1021
      %v1061 = vpop.f32.mrf.mxu0
      %v1062 = vadd.f32 %v1018, %v1061
      %1063 = vmatmul.f32.gmra.mxu0 %v1024
      %v1064 = vpop.f32.mrf.mxu0
      %v1065 = vadd.f32 %v1018, %v1064
      %1066 = vmatmul.f32.gmra.mxu0 %v1027
      %v1067 = vpop.f32.mrf.mxu0
      %v1068 = vadd.f32 %v1018, %v1067
      %1069 = vmatmul.f32.gmra.mxu0 %v1030
      %v1070 = vpop.f32.mrf.mxu0
      %v1071 = vadd.f32 %v1018, %v1070
      %1072 = vmatmul.f32.gmra.mxu0 %v1033
      %v1073 = vpop.f32.mrf.mxu0
      %v1074 = vadd.f32 %v1018, %v1073
      %1075 = vmatmul.f32.gmra.mxu0 %v1036
      %v1076 = vpop.f32.mrf.mxu0
      %v1077 = vadd.f32 %v1018, %v1076
      %1078 = vmatmul.f32.gmra.mxu0 %v1039
      %v1079 = vpop.f32.mrf.mxu0
      %v1080 = vadd.f32 %v1018, %v1079
      %1081 = vmatmul.f32.gmra.mxu0 %v1042
      %v1082 = vpop.f32.mrf.mxu0
      %v1083 = vadd.f32 %v1018, %v1082
      %1084 = vdwg.mxu0
      %v1085 = vld [vmem:[%s355] sm:$0xff]
      %v1086 = vld [vmem:[%s355 + $0x8] sm:$0xff]
      %v1087 = vld [vmem:[%s355 + $0x10] sm:$0xff]
      %v1088 = vld [vmem:[%s355 + $0x18] sm:$0xff]
      %v1089 = vld [vmem:[%s355 + $0x20] sm:$0xff]
      %v1090 = vld [vmem:[%s355 + $0x28] sm:$0xff]
      %v1091 = vld [vmem:[%s355 + $0x30] sm:$0xff]
      %v1092 = vld [vmem:[%s355 + $0x38] sm:$0xff]
      %v1093 = vadd.f32 %v1085, %v1062
      %v1094 = vadd.f32 %v1086, %v1065
      %v1095 = vadd.f32 %v1087, %v1068
      %v1096 = vadd.f32 %v1088, %v1071
      %v1097 = vadd.f32 %v1089, %v1074
      %v1098 = vadd.f32 %v1090, %v1077
      %v1099 = vadd.f32 %v1091, %v1080
      %v1100 = vadd.f32 %v1092, %v1083
      %1101 = vst.msk [vmem:[%s365] sm:$0xff] %vm384, %v1093
      %1102 = vst.msk [vmem:[%s365 + $0x8] sm:$0xff] %vm384, %v1094
      %1103 = vst.msk [vmem:[%s365 + $0x10] sm:$0xff] %vm384, %v1095
      %1104 = vst.msk [vmem:[%s365 + $0x18] sm:$0xff] %vm384, %v1096
      %1105 = vst.msk [vmem:[%s365 + $0x20] sm:$0xff] %vm384, %v1097
      %1106 = vst.msk [vmem:[%s365 + $0x28] sm:$0xff] %vm384, %v1098
      %1107 = vst.msk [vmem:[%s365 + $0x30] sm:$0xff] %vm384, %v1099
      %1108 = vst.msk [vmem:[%s365 + $0x38] sm:$0xff] %vm384, %v1100
      %s1109 = smul.u32 8, %s22
      %p1110 = scmp.lt.s32.totalorder %s21, 1
      %s1111 = scalar_select %p1110, %s21, 1
      %p1112 = scmp.lt.s32.totalorder %s1109, 7
      %s1113 = scalar_select %p1112, %s1109, 7
      %s1114 = smul.addr %s1111, 8
      %s1115 = sadd.s32 %s1113, %s1114
      %s1116 = smul.addr %s1115, 8
      %s1117 = scalar_lea.vmem %s6, %s1116
      // Predicated region
      $region45: #{spatial_self_attention.3} parent=43 // pred_check
        %p1118 = pneg %p199
      $region46: #{spatial_self_attention.3} parent=43 // pred_check_branch
        %1120 = sbr.rel (%p1118) target = $region48
      $region47: #{spatial_self_attention.3} parent=43 // pred_region
        %s1121 = smul.u32 8, %s22
      $region48: #{spatial_self_attention.3} parent=43 // pred_fallthru
        _
    $region44: #{spatial_self_attention.3} parent=5 // pred_fallthru
      _
    %p1122 = scmp.le.s32.totalorder 2, %s12
    // Predicated region
    $region49: #{spatial_self_attention.3} parent=5 // pred_check
      %p1123 = pneg %p1122
    $region50: #{spatial_self_attention.3} parent=5 // pred_check_branch
      %1125 = sbr.rel (%p1123) target = $region52
    $region51: #{spatial_self_attention.3} parent=5 // pred_region
      %s1126 = ssub.s32 %s12, 2
      // Predicated region
      $region53: #{spatial_self_attention.3} parent=51 // pred_check
        %p1127 = pneg %p205
      $region54: #{spatial_self_attention.3} parent=51 // pred_check_branch
        %1129 = sbr.rel (%p1127) target = $region56
      $region55: #{spatial_self_attention.3} parent=51 // pred_region
        %s1130 = smul.u32 8, %s24
        %p1131 = scmp.lt.s32.totalorder %s23, 1
        %s1132 = scalar_select %p1131, %s23, 1
        %p1133 = scmp.lt.s32.totalorder %s1130, 7
        %s1134 = scalar_select %p1133, %s1130, 7
        %s1135 = smul.addr %s1132, 8
        %s1136 = sadd.s32 %s1134, %s1135
        %s1137 = smul.addr %s1136, 8
        %s1138 = scalar_lea.vmem %s6, %s1137
      $region56: #{spatial_self_attention.3} parent=51 // pred_fallthru
        _
    $region52: #{spatial_self_attention.3} parent=5 // pred_fallthru
      _
  $region6: #{spatial_self_attention.3} parent=0 // loop_footer
    %s16 = sadd.s32 1, %s12
  $region7: #{spatial_self_attention.3} parent=0 // loop_footer_branch
    %11 = sbr.rel target = $region3
  $region8: #{spatial_self_attention.3} parent=0 // loop_exit
    _

</llo_original>
